<compile_context>
chip_gen: v7x
topology: tpu7x:2x2x1
jax: 0.10.0
libtpu: 0.0.40
codegen_flags: <defaults>
</compile_context>

<pallas_src>
import functools

import jax
import jax.numpy as jnp
from jax import lax
from jax.experimental import pallas as pl
from jax.experimental.pallas import tpu as pltpu


def _round_up(x, m):
    return (x + m - 1) // m * m


def _pick_row_block(H, W):
    """Largest divisor R of H with R*W <= 128 (M of the fused matmul)."""
    best = 1
    for d in range(1, H + 1):
        if H % d == 0 and d * W <= 128:
            best = d
    return best


def _pick_batch_block(B):
    """Largest divisor of B (<= 8) that still leaves >= 2 grid steps (v7x: 2 TCs)."""
    best = 1
    for d in range(1, min(B, 8) + 1):
        if B % d == 0 and (B // d) >= 2:
            best = d
    return best


def _vmem_limit_bytes(bblk, Hp, Wp, Cin):
    # Padded bf16 VMEM footprint of one image block (Wp on sublanes, Cin on lanes),
    # double-buffered by the BlockSpec pipeline, plus weights/bias/output/scratch slack.
    tile = bblk * Hp * _round_up(Wp, 16) * _round_up(Cin, 128) * 2
    est = 2 * tile + (4 << 20)
    return int(min(48 << 20, max(16 << 20, est)))   # cap for v7x's 64 MiB physical VMEM


def _conv_relu_pool_kernel(x_ref, w_ref, b_ref, o_ref, *, H, W, R, cpad, bblk):
    # x_ref: (Bblk, Hp, Wp, Cin) bf16  zero-padded NHWC image block
    # w_ref: (9*Cin, CPAD)       bf16  conv weights, (dy, dx, ci)-major, Cout padded to 128
    # b_ref: (1, CPAD)           f32   bias (zero padded)
    # o_ref: (Bblk, 1, CPAD)     f32   pooled feature rows for this batch block
    wmat = w_ref[...]                       # resident (9*Cin, CPAD) bf16
    bias = b_ref[...]                       # (1, CPAD) f32
    nblk = H // R
    inv_hw = 1.0 / float(H * W)

    for b in range(bblk):                   # small static unroll over the batch block
        def blk_body(i, acc):
            h0 = pl.multiple_of(i * R, R)
            # Build the (R*W, 9*Cin) im2col LHS for output rows [h0, h0+R) with static
            # slices + concatenations only (safe Mosaic lowering, no vector reshapes).
            taps = []
            for dy in range(3):
                for dx in range(3):
                    a = x_ref[b, pl.ds(h0 + dy, R), dx:dx + W, :]          # (R, W, Cin)
                    taps.append(
                        jnp.concatenate([a[r] for r in range(R)], axis=0)  # (R*W, Cin)
                    )
            lhs = jnp.concatenate(taps, axis=-1)                           # (R*W, 9*Cin)
            # One fused MXU matmul per row-block, f32 accumulation.
            pre = jnp.dot(lhs, wmat, preferred_element_type=jnp.float32)   # (R*W, CPAD)
            # bias + ReLU in f32 (VPU); accumulate elementwise, reduce once at the end.
            return acc + jnp.maximum(pre + bias, 0.0)

        acc = lax.fori_loop(0, nblk, blk_body,
                            jnp.zeros((R * W, cpad), jnp.float32),
                            unroll=(nblk <= 8))
        pooled = jnp.sum(acc, axis=0, keepdims=True) * inv_hw              # one XLU reduce
        o_ref[b] = pooled                                                  # (1, CPAD) f32


def feature_extraction(image_nchw, weight, bias):
    """image_nchw: (B, Cin, H, W); weight: (3, 3, Cin, Cout) HWIO; bias: (Cout,).
    Returns (B, Cout) features, matching FeatureExtraction.forward."""
    B, Cin, H, W = image_nchw.shape
    kh, kw, wcin, Cout = weight.shape
    assert (kh, kw) == (3, 3) and wcin == Cin
    CPAD = _round_up(max(Cout, 128), 128)
    Hp, Wp = H + 2, W + 2
    R = _pick_row_block(H, W)
    Bblk = _pick_batch_block(B)

    # ---- thin host glue (single fused transpose+pad+cast pass; no im2col blow-up) ----
    x = jnp.transpose(image_nchw, (0, 2, 3, 1))                             # (B, H, W, Cin)
    xp = jnp.pad(x, ((0, 0), (1, 1), (1, 1), (0, 0))).astype(jnp.bfloat16)  # (B, Hp, Wp, Cin)

    w2 = weight.reshape(9 * Cin, Cout)                                      # (dy,dx,ci)-major
    w2 = jnp.pad(w2, ((0, 0), (0, CPAD - Cout))).astype(jnp.bfloat16)       # (9*Cin, CPAD)
    b2 = jnp.pad(bias.astype(jnp.float32).reshape(1, Cout),
                 ((0, 0), (0, CPAD - Cout)))                                # (1, CPAD)

    kernel = functools.partial(_conv_relu_pool_kernel,
                               H=H, W=W, R=R, cpad=CPAD, bblk=Bblk)

    out = pl.pallas_call(
        kernel,
        out_shape=jax.ShapeDtypeStruct((B, 1, CPAD), jnp.float32),
        grid=(B // Bblk,),
        in_specs=[
            pl.BlockSpec((Bblk, Hp, Wp, Cin), lambda i: (i, 0, 0, 0)),      # Bblk images / step
            pl.BlockSpec((9 * Cin, CPAD), lambda i: (0, 0)),                # weights resident
            pl.BlockSpec((1, CPAD), lambda i: (0, 0)),                      # bias resident
        ],
        out_specs=pl.BlockSpec((Bblk, 1, CPAD), lambda i: (i, 0, 0)),       # lane-dense rows
        compiler_params=pltpu.CompilerParams(
            dimension_semantics=("parallel",),      # batch-block axis shards across v7x TCs
            vmem_limit_bytes=_vmem_limit_bytes(Bblk, Hp, Wp, Cin),
        ),
    )(xp, w2, b2)

    return out.reshape(B, CPAD)[:, :Cout]            # features.reshape((B, C))


def _reference(image_nchw, weight, bias):
    # pure-JAX reference: conv2d(pad=1) -> relu -> global avg pool -> (B, C)
    x = jnp.transpose(image_nchw, (0, 2, 3, 1)).astype(jnp.float32)
    y = lax.conv_general_dilated(
        x, weight.astype(jnp.float32),
        window_strides=(1, 1), padding="SAME",
        dimension_numbers=("NHWC", "HWIO", "NHWC"),
        precision=lax.Precision.HIGHEST)
    y = jnp.maximum(y + bias.astype(jnp.float32), 0.0)
    return jnp.mean(y, axis=(1, 2))


if __name__ == "__main__":
    B, Cin, H, W, Cout = 2, 4, 16, 16, 32
    key = jax.random.PRNGKey(0)
    k_img, k_w, k_b = jax.random.split(key, 3)
    image = jax.random.normal(k_img, (B, Cin, H, W), dtype=jnp.float32)      # NCHW like PyTorch
    weight = jax.random.normal(k_w, (3, 3, Cin, Cout), dtype=jnp.float32) * 0.1
    bias = jax.random.normal(k_b, (Cout,), dtype=jnp.float32) * 0.1

    feats = jax.block_until_ready(feature_extraction(image, weight, bias))
    assert feats.shape == (B, Cout)

    # Tight check vs. a reference fed the same bf16-rounded inputs (kernel uses bf16 MXU
    # operands with f32 accumulation; tolerance widened slightly for the fused-tap
    # accumulation order), plus a looser check vs. the pure-f32 module semantics.
    img_bf = image.astype(jnp.bfloat16).astype(jnp.float32)
    w_bf = weight.astype(jnp.bfloat16).astype(jnp.float32)
    ref_bf = _reference(img_bf, w_bf, bias)
    ref_f32 = _reference(image, weight, bias)
    assert jnp.allclose(feats, ref_bf, atol=5e-4, rtol=5e-4)
    assert jnp.allclose(feats, ref_f32, atol=2e-2, rtol=2e-2)
    print("KERNEL_OK")
</pallas_src>

<mosaic_0001>
module attributes {stable_mosaic.version = 11 : i64} {
  func.func @_conv_relu_pool_kernel(%arg0: i32, %arg1: memref<1x18x18x4xbf16, #tpu.memory_space<vmem>>, %arg2: memref<36x128xbf16, #tpu.memory_space<vmem>>, %arg3: memref<1x128xf32, #tpu.memory_space<vmem>>, %arg4: memref<1x1x128xf32, #tpu.memory_space<vmem>>) attributes {dimension_semantics = [#tpu.dimension_semantics<parallel>], iteration_bounds = array<i64: 2>, scalar_prefetch = 0 : i64, scratch_operands = 0 : i64, tpu.core_type = #tpu.core_type<tc>, window_params = [{transform_indices = @transform_0, window_bounds = array<i64: 1, 18, 18, 4>}, {pipeline_mode = #tpu.pipeline_mode<synchronous>, transform_indices = @transform_1, window_bounds = array<i64: 36, 128>}, {pipeline_mode = #tpu.pipeline_mode<synchronous>, transform_indices = @transform_2, window_bounds = array<i64: 1, 128>}, {transform_indices = @transform_3, window_bounds = array<i64: 1, 1, 128>}]} {
    %c0 = arith.constant 0 : index
    %c0_0 = arith.constant 0 : index
    %0 = vector.load %arg2[%c0, %c0_0] : memref<36x128xbf16, #tpu.memory_space<vmem>>, vector<36x128xbf16>
    %c0_1 = arith.constant 0 : index
    %c0_2 = arith.constant 0 : index
    %1 = vector.load %arg3[%c0_1, %c0_2] : memref<1x128xf32, #tpu.memory_space<vmem>>, vector<1x128xf32>
    %cst = arith.constant 0.000000e+00 : f32
    %2 = vector.broadcast %cst : f32 to vector<128x128xf32>
    %c0_i32 = arith.constant 0 : i32
    %c8_i32 = arith.constant 8 : i32
    %3 = arith.muli %c0_i32, %c8_i32 : i32
    %4 = tpu.assume_multiple %3, 8 : i32
    %c0_i32_3 = arith.constant 0 : i32
    %5 = arith.addi %4, %c0_i32_3 : i32
    %c0_4 = arith.constant 0 : index
    %6 = arith.index_cast %5 : i32 to index
    %c0_5 = arith.constant 0 : index
    %c0_6 = arith.constant 0 : index
    %7 = vector.load %arg1[%c0_4, %6, %c0_5, %c0_6] : memref<1x18x18x4xbf16, #tpu.memory_space<vmem>>, vector<1x8x16x4xbf16>
    %8 = vector.shape_cast %7 : vector<1x8x16x4xbf16> to vector<8x16x4xbf16>
    %9 = vector.extract_strided_slice %8 {offsets = [0, 0, 0], sizes = [1, 16, 4], strides = [1, 1, 1]} : vector<8x16x4xbf16> to vector<1x16x4xbf16>
    %10 = vector.shape_cast %9 : vector<1x16x4xbf16> to vector<16x4xbf16>
    %11 = vector.extract_strided_slice %8 {offsets = [1, 0, 0], sizes = [1, 16, 4], strides = [1, 1, 1]} : vector<8x16x4xbf16> to vector<1x16x4xbf16>
    %12 = vector.shape_cast %11 : vector<1x16x4xbf16> to vector<16x4xbf16>
    %13 = vector.extract_strided_slice %8 {offsets = [2, 0, 0], sizes = [1, 16, 4], strides = [1, 1, 1]} : vector<8x16x4xbf16> to vector<1x16x4xbf16>
    %14 = vector.shape_cast %13 : vector<1x16x4xbf16> to vector<16x4xbf16>
    %15 = vector.extract_strided_slice %8 {offsets = [3, 0, 0], sizes = [1, 16, 4], strides = [1, 1, 1]} : vector<8x16x4xbf16> to vector<1x16x4xbf16>
    %16 = vector.shape_cast %15 : vector<1x16x4xbf16> to vector<16x4xbf16>
    %17 = vector.extract_strided_slice %8 {offsets = [4, 0, 0], sizes = [1, 16, 4], strides = [1, 1, 1]} : vector<8x16x4xbf16> to vector<1x16x4xbf16>
    %18 = vector.shape_cast %17 : vector<1x16x4xbf16> to vector<16x4xbf16>
    %19 = vector.extract_strided_slice %8 {offsets = [5, 0, 0], sizes = [1, 16, 4], strides = [1, 1, 1]} : vector<8x16x4xbf16> to vector<1x16x4xbf16>
    %20 = vector.shape_cast %19 : vector<1x16x4xbf16> to vector<16x4xbf16>
    %21 = vector.extract_strided_slice %8 {offsets = [6, 0, 0], sizes = [1, 16, 4], strides = [1, 1, 1]} : vector<8x16x4xbf16> to vector<1x16x4xbf16>
    %22 = vector.shape_cast %21 : vector<1x16x4xbf16> to vector<16x4xbf16>
    %23 = vector.extract_strided_slice %8 {offsets = [7, 0, 0], sizes = [1, 16, 4], strides = [1, 1, 1]} : vector<8x16x4xbf16> to vector<1x16x4xbf16>
    %24 = vector.shape_cast %23 : vector<1x16x4xbf16> to vector<16x4xbf16>
    %25 = tpu.concatenate %10, %12, %14, %16, %18, %20, %22, %24 in 0 : vector<16x4xbf16>, vector<16x4xbf16>, vector<16x4xbf16>, vector<16x4xbf16>, vector<16x4xbf16>, vector<16x4xbf16>, vector<16x4xbf16>, vector<16x4xbf16> -> vector<128x4xbf16>
    %c0_i32_7 = arith.constant 0 : i32
    %26 = arith.addi %4, %c0_i32_7 : i32
    %c0_8 = arith.constant 0 : index
    %27 = arith.index_cast %26 : i32 to index
    %c1 = arith.constant 1 : index
    %c0_9 = arith.constant 0 : index
    %28 = vector.load %arg1[%c0_8, %27, %c1, %c0_9] : memref<1x18x18x4xbf16, #tpu.memory_space<vmem>>, vector<1x8x16x4xbf16>
    %29 = vector.shape_cast %28 : vector<1x8x16x4xbf16> to vector<8x16x4xbf16>
    %30 = vector.extract_strided_slice %29 {offsets = [0, 0, 0], sizes = [1, 16, 4], strides = [1, 1, 1]} : vector<8x16x4xbf16> to vector<1x16x4xbf16>
    %31 = vector.shape_cast %30 : vector<1x16x4xbf16> to vector<16x4xbf16>
    %32 = vector.extract_strided_slice %29 {offsets = [1, 0, 0], sizes = [1, 16, 4], strides = [1, 1, 1]} : vector<8x16x4xbf16> to vector<1x16x4xbf16>
    %33 = vector.shape_cast %32 : vector<1x16x4xbf16> to vector<16x4xbf16>
    %34 = vector.extract_strided_slice %29 {offsets = [2, 0, 0], sizes = [1, 16, 4], strides = [1, 1, 1]} : vector<8x16x4xbf16> to vector<1x16x4xbf16>
    %35 = vector.shape_cast %34 : vector<1x16x4xbf16> to vector<16x4xbf16>
    %36 = vector.extract_strided_slice %29 {offsets = [3, 0, 0], sizes = [1, 16, 4], strides = [1, 1, 1]} : vector<8x16x4xbf16> to vector<1x16x4xbf16>
    %37 = vector.shape_cast %36 : vector<1x16x4xbf16> to vector<16x4xbf16>
    %38 = vector.extract_strided_slice %29 {offsets = [4, 0, 0], sizes = [1, 16, 4], strides = [1, 1, 1]} : vector<8x16x4xbf16> to vector<1x16x4xbf16>
    %39 = vector.shape_cast %38 : vector<1x16x4xbf16> to vector<16x4xbf16>
    %40 = vector.extract_strided_slice %29 {offsets = [5, 0, 0], sizes = [1, 16, 4], strides = [1, 1, 1]} : vector<8x16x4xbf16> to vector<1x16x4xbf16>
    %41 = vector.shape_cast %40 : vector<1x16x4xbf16> to vector<16x4xbf16>
    %42 = vector.extract_strided_slice %29 {offsets = [6, 0, 0], sizes = [1, 16, 4], strides = [1, 1, 1]} : vector<8x16x4xbf16> to vector<1x16x4xbf16>
    %43 = vector.shape_cast %42 : vector<1x16x4xbf16> to vector<16x4xbf16>
    %44 = vector.extract_strided_slice %29 {offsets = [7, 0, 0], sizes = [1, 16, 4], strides = [1, 1, 1]} : vector<8x16x4xbf16> to vector<1x16x4xbf16>
    %45 = vector.shape_cast %44 : vector<1x16x4xbf16> to vector<16x4xbf16>
    %46 = tpu.concatenate %31, %33, %35, %37, %39, %41, %43, %45 in 0 : vector<16x4xbf16>, vector<16x4xbf16>, vector<16x4xbf16>, vector<16x4xbf16>, vector<16x4xbf16>, vector<16x4xbf16>, vector<16x4xbf16>, vector<16x4xbf16> -> vector<128x4xbf16>
    %c0_i32_10 = arith.constant 0 : i32
    %47 = arith.addi %4, %c0_i32_10 : i32
    %c0_11 = arith.constant 0 : index
    %48 = arith.index_cast %47 : i32 to index
    %c2 = arith.constant 2 : index
    %c0_12 = arith.constant 0 : index
    %49 = vector.load %arg1[%c0_11, %48, %c2, %c0_12] : memref<1x18x18x4xbf16, #tpu.memory_space<vmem>>, vector<1x8x16x4xbf16>
    %50 = vector.shape_cast %49 : vector<1x8x16x4xbf16> to vector<8x16x4xbf16>
    %51 = vector.extract_strided_slice %50 {offsets = [0, 0, 0], sizes = [1, 16, 4], strides = [1, 1, 1]} : vector<8x16x4xbf16> to vector<1x16x4xbf16>
    %52 = vector.shape_cast %51 : vector<1x16x4xbf16> to vector<16x4xbf16>
    %53 = vector.extract_strided_slice %50 {offsets = [1, 0, 0], sizes = [1, 16, 4], strides = [1, 1, 1]} : vector<8x16x4xbf16> to vector<1x16x4xbf16>
    %54 = vector.shape_cast %53 : vector<1x16x4xbf16> to vector<16x4xbf16>
    %55 = vector.extract_strided_slice %50 {offsets = [2, 0, 0], sizes = [1, 16, 4], strides = [1, 1, 1]} : vector<8x16x4xbf16> to vector<1x16x4xbf16>
    %56 = vector.shape_cast %55 : vector<1x16x4xbf16> to vector<16x4xbf16>
    %57 = vector.extract_strided_slice %50 {offsets = [3, 0, 0], sizes = [1, 16, 4], strides = [1, 1, 1]} : vector<8x16x4xbf16> to vector<1x16x4xbf16>
    %58 = vector.shape_cast %57 : vector<1x16x4xbf16> to vector<16x4xbf16>
    %59 = vector.extract_strided_slice %50 {offsets = [4, 0, 0], sizes = [1, 16, 4], strides = [1, 1, 1]} : vector<8x16x4xbf16> to vector<1x16x4xbf16>
    %60 = vector.shape_cast %59 : vector<1x16x4xbf16> to vector<16x4xbf16>
    %61 = vector.extract_strided_slice %50 {offsets = [5, 0, 0], sizes = [1, 16, 4], strides = [1, 1, 1]} : vector<8x16x4xbf16> to vector<1x16x4xbf16>
    %62 = vector.shape_cast %61 : vector<1x16x4xbf16> to vector<16x4xbf16>
    %63 = vector.extract_strided_slice %50 {offsets = [6, 0, 0], sizes = [1, 16, 4], strides = [1, 1, 1]} : vector<8x16x4xbf16> to vector<1x16x4xbf16>
    %64 = vector.shape_cast %63 : vector<1x16x4xbf16> to vector<16x4xbf16>
    %65 = vector.extract_strided_slice %50 {offsets = [7, 0, 0], sizes = [1, 16, 4], strides = [1, 1, 1]} : vector<8x16x4xbf16> to vector<1x16x4xbf16>
    %66 = vector.shape_cast %65 : vector<1x16x4xbf16> to vector<16x4xbf16>
    %67 = tpu.concatenate %52, %54, %56, %58, %60, %62, %64, %66 in 0 : vector<16x4xbf16>, vector<16x4xbf16>, vector<16x4xbf16>, vector<16x4xbf16>, vector<16x4xbf16>, vector<16x4xbf16>, vector<16x4xbf16>, vector<16x4xbf16> -> vector<128x4xbf16>
    %c1_i32 = arith.constant 1 : i32
    %68 = arith.addi %4, %c1_i32 : i32
    %c0_13 = arith.constant 0 : index
    %69 = arith.index_cast %68 : i32 to index
    %c0_14 = arith.constant 0 : index
    %c0_15 = arith.constant 0 : index
    %70 = vector.load %arg1[%c0_13, %69, %c0_14, %c0_15] : memref<1x18x18x4xbf16, #tpu.memory_space<vmem>>, vector<1x8x16x4xbf16>
    %71 = vector.shape_cast %70 : vector<1x8x16x4xbf16> to vector<8x16x4xbf16>
    %72 = vector.extract_strided_slice %71 {offsets = [0, 0, 0], sizes = [1, 16, 4], strides = [1, 1, 1]} : vector<8x16x4xbf16> to vector<1x16x4xbf16>
    %73 = vector.shape_cast %72 : vector<1x16x4xbf16> to vector<16x4xbf16>
    %74 = vector.extract_strided_slice %71 {offsets = [1, 0, 0], sizes = [1, 16, 4], strides = [1, 1, 1]} : vector<8x16x4xbf16> to vector<1x16x4xbf16>
    %75 = vector.shape_cast %74 : vector<1x16x4xbf16> to vector<16x4xbf16>
    %76 = vector.extract_strided_slice %71 {offsets = [2, 0, 0], sizes = [1, 16, 4], strides = [1, 1, 1]} : vector<8x16x4xbf16> to vector<1x16x4xbf16>
    %77 = vector.shape_cast %76 : vector<1x16x4xbf16> to vector<16x4xbf16>
    %78 = vector.extract_strided_slice %71 {offsets = [3, 0, 0], sizes = [1, 16, 4], strides = [1, 1, 1]} : vector<8x16x4xbf16> to vector<1x16x4xbf16>
    %79 = vector.shape_cast %78 : vector<1x16x4xbf16> to vector<16x4xbf16>
    %80 = vector.extract_strided_slice %71 {offsets = [4, 0, 0], sizes = [1, 16, 4], strides = [1, 1, 1]} : vector<8x16x4xbf16> to vector<1x16x4xbf16>
    %81 = vector.shape_cast %80 : vector<1x16x4xbf16> to vector<16x4xbf16>
    %82 = vector.extract_strided_slice %71 {offsets = [5, 0, 0], sizes = [1, 16, 4], strides = [1, 1, 1]} : vector<8x16x4xbf16> to vector<1x16x4xbf16>
    %83 = vector.shape_cast %82 : vector<1x16x4xbf16> to vector<16x4xbf16>
    %84 = vector.extract_strided_slice %71 {offsets = [6, 0, 0], sizes = [1, 16, 4], strides = [1, 1, 1]} : vector<8x16x4xbf16> to vector<1x16x4xbf16>
    %85 = vector.shape_cast %84 : vector<1x16x4xbf16> to vector<16x4xbf16>
    %86 = vector.extract_strided_slice %71 {offsets = [7, 0, 0], sizes = [1, 16, 4], strides = [1, 1, 1]} : vector<8x16x4xbf16> to vector<1x16x4xbf16>
    %87 = vector.shape_cast %86 : vector<1x16x4xbf16> to vector<16x4xbf16>
    %88 = tpu.concatenate %73, %75, %77, %79, %81, %83, %85, %87 in 0 : vector<16x4xbf16>, vector<16x4xbf16>, vector<16x4xbf16>, vector<16x4xbf16>, vector<16x4xbf16>, vector<16x4xbf16>, vector<16x4xbf16>, vector<16x4xbf16> -> vector<128x4xbf16>
    %c1_i32_16 = arith.constant 1 : i32
    %89 = arith.addi %4, %c1_i32_16 : i32
    %c0_17 = arith.constant 0 : index
    %90 = arith.index_cast %89 : i32 to index
    %c1_18 = arith.constant 1 : index
    %c0_19 = arith.constant 0 : index
    %91 = vector.load %arg1[%c0_17, %90, %c1_18, %c0_19] : memref<1x18x18x4xbf16, #tpu.memory_space<vmem>>, vector<1x8x16x4xbf16>
    %92 = vector.shape_cast %91 : vector<1x8x16x4xbf16> to vector<8x16x4xbf16>
    %93 = vector.extract_strided_slice %92 {offsets = [0, 0, 0], sizes = [1, 16, 4], strides = [1, 1, 1]} : vector<8x16x4xbf16> to vector<1x16x4xbf16>
    %94 = vector.shape_cast %93 : vector<1x16x4xbf16> to vector<16x4xbf16>
    %95 = vector.extract_strided_slice %92 {offsets = [1, 0, 0], sizes = [1, 16, 4], strides = [1, 1, 1]} : vector<8x16x4xbf16> to vector<1x16x4xbf16>
    %96 = vector.shape_cast %95 : vector<1x16x4xbf16> to vector<16x4xbf16>
    %97 = vector.extract_strided_slice %92 {offsets = [2, 0, 0], sizes = [1, 16, 4], strides = [1, 1, 1]} : vector<8x16x4xbf16> to vector<1x16x4xbf16>
    %98 = vector.shape_cast %97 : vector<1x16x4xbf16> to vector<16x4xbf16>
    %99 = vector.extract_strided_slice %92 {offsets = [3, 0, 0], sizes = [1, 16, 4], strides = [1, 1, 1]} : vector<8x16x4xbf16> to vector<1x16x4xbf16>
    %100 = vector.shape_cast %99 : vector<1x16x4xbf16> to vector<16x4xbf16>
    %101 = vector.extract_strided_slice %92 {offsets = [4, 0, 0], sizes = [1, 16, 4], strides = [1, 1, 1]} : vector<8x16x4xbf16> to vector<1x16x4xbf16>
    %102 = vector.shape_cast %101 : vector<1x16x4xbf16> to vector<16x4xbf16>
    %103 = vector.extract_strided_slice %92 {offsets = [5, 0, 0], sizes = [1, 16, 4], strides = [1, 1, 1]} : vector<8x16x4xbf16> to vector<1x16x4xbf16>
    %104 = vector.shape_cast %103 : vector<1x16x4xbf16> to vector<16x4xbf16>
    %105 = vector.extract_strided_slice %92 {offsets = [6, 0, 0], sizes = [1, 16, 4], strides = [1, 1, 1]} : vector<8x16x4xbf16> to vector<1x16x4xbf16>
    %106 = vector.shape_cast %105 : vector<1x16x4xbf16> to vector<16x4xbf16>
    %107 = vector.extract_strided_slice %92 {offsets = [7, 0, 0], sizes = [1, 16, 4], strides = [1, 1, 1]} : vector<8x16x4xbf16> to vector<1x16x4xbf16>
    %108 = vector.shape_cast %107 : vector<1x16x4xbf16> to vector<16x4xbf16>
    %109 = tpu.concatenate %94, %96, %98, %100, %102, %104, %106, %108 in 0 : vector<16x4xbf16>, vector<16x4xbf16>, vector<16x4xbf16>, vector<16x4xbf16>, vector<16x4xbf16>, vector<16x4xbf16>, vector<16x4xbf16>, vector<16x4xbf16> -> vector<128x4xbf16>
    %c1_i32_20 = arith.constant 1 : i32
    %110 = arith.addi %4, %c1_i32_20 : i32
    %c0_21 = arith.constant 0 : index
    %111 = arith.index_cast %110 : i32 to index
    %c2_22 = arith.constant 2 : index
    %c0_23 = arith.constant 0 : index
    %112 = vector.load %arg1[%c0_21, %111, %c2_22, %c0_23] : memref<1x18x18x4xbf16, #tpu.memory_space<vmem>>, vector<1x8x16x4xbf16>
    %113 = vector.shape_cast %112 : vector<1x8x16x4xbf16> to vector<8x16x4xbf16>
    %114 = vector.extract_strided_slice %113 {offsets = [0, 0, 0], sizes = [1, 16, 4], strides = [1, 1, 1]} : vector<8x16x4xbf16> to vector<1x16x4xbf16>
    %115 = vector.shape_cast %114 : vector<1x16x4xbf16> to vector<16x4xbf16>
    %116 = vector.extract_strided_slice %113 {offsets = [1, 0, 0], sizes = [1, 16, 4], strides = [1, 1, 1]} : vector<8x16x4xbf16> to vector<1x16x4xbf16>
    %117 = vector.shape_cast %116 : vector<1x16x4xbf16> to vector<16x4xbf16>
    %118 = vector.extract_strided_slice %113 {offsets = [2, 0, 0], sizes = [1, 16, 4], strides = [1, 1, 1]} : vector<8x16x4xbf16> to vector<1x16x4xbf16>
    %119 = vector.shape_cast %118 : vector<1x16x4xbf16> to vector<16x4xbf16>
    %120 = vector.extract_strided_slice %113 {offsets = [3, 0, 0], sizes = [1, 16, 4], strides = [1, 1, 1]} : vector<8x16x4xbf16> to vector<1x16x4xbf16>
    %121 = vector.shape_cast %120 : vector<1x16x4xbf16> to vector<16x4xbf16>
    %122 = vector.extract_strided_slice %113 {offsets = [4, 0, 0], sizes = [1, 16, 4], strides = [1, 1, 1]} : vector<8x16x4xbf16> to vector<1x16x4xbf16>
    %123 = vector.shape_cast %122 : vector<1x16x4xbf16> to vector<16x4xbf16>
    %124 = vector.extract_strided_slice %113 {offsets = [5, 0, 0], sizes = [1, 16, 4], strides = [1, 1, 1]} : vector<8x16x4xbf16> to vector<1x16x4xbf16>
    %125 = vector.shape_cast %124 : vector<1x16x4xbf16> to vector<16x4xbf16>
    %126 = vector.extract_strided_slice %113 {offsets = [6, 0, 0], sizes = [1, 16, 4], strides = [1, 1, 1]} : vector<8x16x4xbf16> to vector<1x16x4xbf16>
    %127 = vector.shape_cast %126 : vector<1x16x4xbf16> to vector<16x4xbf16>
    %128 = vector.extract_strided_slice %113 {offsets = [7, 0, 0], sizes = [1, 16, 4], strides = [1, 1, 1]} : vector<8x16x4xbf16> to vector<1x16x4xbf16>
    %129 = vector.shape_cast %128 : vector<1x16x4xbf16> to vector<16x4xbf16>
    %130 = tpu.concatenate %115, %117, %119, %121, %123, %125, %127, %129 in 0 : vector<16x4xbf16>, vector<16x4xbf16>, vector<16x4xbf16>, vector<16x4xbf16>, vector<16x4xbf16>, vector<16x4xbf16>, vector<16x4xbf16>, vector<16x4xbf16> -> vector<128x4xbf16>
    %c2_i32 = arith.constant 2 : i32
    %131 = arith.addi %4, %c2_i32 : i32
    %c0_24 = arith.constant 0 : index
    %132 = arith.index_cast %131 : i32 to index
    %c0_25 = arith.constant 0 : index
    %c0_26 = arith.constant 0 : index
    %133 = vector.load %arg1[%c0_24, %132, %c0_25, %c0_26] : memref<1x18x18x4xbf16, #tpu.memory_space<vmem>>, vector<1x8x16x4xbf16>
    %134 = vector.shape_cast %133 : vector<1x8x16x4xbf16> to vector<8x16x4xbf16>
    %135 = vector.extract_strided_slice %134 {offsets = [0, 0, 0], sizes = [1, 16, 4], strides = [1, 1, 1]} : vector<8x16x4xbf16> to vector<1x16x4xbf16>
    %136 = vector.shape_cast %135 : vector<1x16x4xbf16> to vector<16x4xbf16>
    %137 = vector.extract_strided_slice %134 {offsets = [1, 0, 0], sizes = [1, 16, 4], strides = [1, 1, 1]} : vector<8x16x4xbf16> to vector<1x16x4xbf16>
    %138 = vector.shape_cast %137 : vector<1x16x4xbf16> to vector<16x4xbf16>
    %139 = vector.extract_strided_slice %134 {offsets = [2, 0, 0], sizes = [1, 16, 4], strides = [1, 1, 1]} : vector<8x16x4xbf16> to vector<1x16x4xbf16>
    %140 = vector.shape_cast %139 : vector<1x16x4xbf16> to vector<16x4xbf16>
    %141 = vector.extract_strided_slice %134 {offsets = [3, 0, 0], sizes = [1, 16, 4], strides = [1, 1, 1]} : vector<8x16x4xbf16> to vector<1x16x4xbf16>
    %142 = vector.shape_cast %141 : vector<1x16x4xbf16> to vector<16x4xbf16>
    %143 = vector.extract_strided_slice %134 {offsets = [4, 0, 0], sizes = [1, 16, 4], strides = [1, 1, 1]} : vector<8x16x4xbf16> to vector<1x16x4xbf16>
    %144 = vector.shape_cast %143 : vector<1x16x4xbf16> to vector<16x4xbf16>
    %145 = vector.extract_strided_slice %134 {offsets = [5, 0, 0], sizes = [1, 16, 4], strides = [1, 1, 1]} : vector<8x16x4xbf16> to vector<1x16x4xbf16>
    %146 = vector.shape_cast %145 : vector<1x16x4xbf16> to vector<16x4xbf16>
    %147 = vector.extract_strided_slice %134 {offsets = [6, 0, 0], sizes = [1, 16, 4], strides = [1, 1, 1]} : vector<8x16x4xbf16> to vector<1x16x4xbf16>
    %148 = vector.shape_cast %147 : vector<1x16x4xbf16> to vector<16x4xbf16>
    %149 = vector.extract_strided_slice %134 {offsets = [7, 0, 0], sizes = [1, 16, 4], strides = [1, 1, 1]} : vector<8x16x4xbf16> to vector<1x16x4xbf16>
    %150 = vector.shape_cast %149 : vector<1x16x4xbf16> to vector<16x4xbf16>
    %151 = tpu.concatenate %136, %138, %140, %142, %144, %146, %148, %150 in 0 : vector<16x4xbf16>, vector<16x4xbf16>, vector<16x4xbf16>, vector<16x4xbf16>, vector<16x4xbf16>, vector<16x4xbf16>, vector<16x4xbf16>, vector<16x4xbf16> -> vector<128x4xbf16>
    %c2_i32_27 = arith.constant 2 : i32
    %152 = arith.addi %4, %c2_i32_27 : i32
    %c0_28 = arith.constant 0 : index
    %153 = arith.index_cast %152 : i32 to index
    %c1_29 = arith.constant 1 : index
    %c0_30 = arith.constant 0 : index
    %154 = vector.load %arg1[%c0_28, %153, %c1_29, %c0_30] : memref<1x18x18x4xbf16, #tpu.memory_space<vmem>>, vector<1x8x16x4xbf16>
    %155 = vector.shape_cast %154 : vector<1x8x16x4xbf16> to vector<8x16x4xbf16>
    %156 = vector.extract_strided_slice %155 {offsets = [0, 0, 0], sizes = [1, 16, 4], strides = [1, 1, 1]} : vector<8x16x4xbf16> to vector<1x16x4xbf16>
    %157 = vector.shape_cast %156 : vector<1x16x4xbf16> to vector<16x4xbf16>
    %158 = vector.extract_strided_slice %155 {offsets = [1, 0, 0], sizes = [1, 16, 4], strides = [1, 1, 1]} : vector<8x16x4xbf16> to vector<1x16x4xbf16>
    %159 = vector.shape_cast %158 : vector<1x16x4xbf16> to vector<16x4xbf16>
    %160 = vector.extract_strided_slice %155 {offsets = [2, 0, 0], sizes = [1, 16, 4], strides = [1, 1, 1]} : vector<8x16x4xbf16> to vector<1x16x4xbf16>
    %161 = vector.shape_cast %160 : vector<1x16x4xbf16> to vector<16x4xbf16>
    %162 = vector.extract_strided_slice %155 {offsets = [3, 0, 0], sizes = [1, 16, 4], strides = [1, 1, 1]} : vector<8x16x4xbf16> to vector<1x16x4xbf16>
    %163 = vector.shape_cast %162 : vector<1x16x4xbf16> to vector<16x4xbf16>
    %164 = vector.extract_strided_slice %155 {offsets = [4, 0, 0], sizes = [1, 16, 4], strides = [1, 1, 1]} : vector<8x16x4xbf16> to vector<1x16x4xbf16>
    %165 = vector.shape_cast %164 : vector<1x16x4xbf16> to vector<16x4xbf16>
    %166 = vector.extract_strided_slice %155 {offsets = [5, 0, 0], sizes = [1, 16, 4], strides = [1, 1, 1]} : vector<8x16x4xbf16> to vector<1x16x4xbf16>
    %167 = vector.shape_cast %166 : vector<1x16x4xbf16> to vector<16x4xbf16>
    %168 = vector.extract_strided_slice %155 {offsets = [6, 0, 0], sizes = [1, 16, 4], strides = [1, 1, 1]} : vector<8x16x4xbf16> to vector<1x16x4xbf16>
    %169 = vector.shape_cast %168 : vector<1x16x4xbf16> to vector<16x4xbf16>
    %170 = vector.extract_strided_slice %155 {offsets = [7, 0, 0], sizes = [1, 16, 4], strides = [1, 1, 1]} : vector<8x16x4xbf16> to vector<1x16x4xbf16>
    %171 = vector.shape_cast %170 : vector<1x16x4xbf16> to vector<16x4xbf16>
    %172 = tpu.concatenate %157, %159, %161, %163, %165, %167, %169, %171 in 0 : vector<16x4xbf16>, vector<16x4xbf16>, vector<16x4xbf16>, vector<16x4xbf16>, vector<16x4xbf16>, vector<16x4xbf16>, vector<16x4xbf16>, vector<16x4xbf16> -> vector<128x4xbf16>
    %c2_i32_31 = arith.constant 2 : i32
    %173 = arith.addi %4, %c2_i32_31 : i32
    %c0_32 = arith.constant 0 : index
    %174 = arith.index_cast %173 : i32 to index
    %c2_33 = arith.constant 2 : index
    %c0_34 = arith.constant 0 : index
    %175 = vector.load %arg1[%c0_32, %174, %c2_33, %c0_34] : memref<1x18x18x4xbf16, #tpu.memory_space<vmem>>, vector<1x8x16x4xbf16>
    %176 = vector.shape_cast %175 : vector<1x8x16x4xbf16> to vector<8x16x4xbf16>
    %177 = vector.extract_strided_slice %176 {offsets = [0, 0, 0], sizes = [1, 16, 4], strides = [1, 1, 1]} : vector<8x16x4xbf16> to vector<1x16x4xbf16>
    %178 = vector.shape_cast %177 : vector<1x16x4xbf16> to vector<16x4xbf16>
    %179 = vector.extract_strided_slice %176 {offsets = [1, 0, 0], sizes = [1, 16, 4], strides = [1, 1, 1]} : vector<8x16x4xbf16> to vector<1x16x4xbf16>
    %180 = vector.shape_cast %179 : vector<1x16x4xbf16> to vector<16x4xbf16>
    %181 = vector.extract_strided_slice %176 {offsets = [2, 0, 0], sizes = [1, 16, 4], strides = [1, 1, 1]} : vector<8x16x4xbf16> to vector<1x16x4xbf16>
    %182 = vector.shape_cast %181 : vector<1x16x4xbf16> to vector<16x4xbf16>
    %183 = vector.extract_strided_slice %176 {offsets = [3, 0, 0], sizes = [1, 16, 4], strides = [1, 1, 1]} : vector<8x16x4xbf16> to vector<1x16x4xbf16>
    %184 = vector.shape_cast %183 : vector<1x16x4xbf16> to vector<16x4xbf16>
    %185 = vector.extract_strided_slice %176 {offsets = [4, 0, 0], sizes = [1, 16, 4], strides = [1, 1, 1]} : vector<8x16x4xbf16> to vector<1x16x4xbf16>
    %186 = vector.shape_cast %185 : vector<1x16x4xbf16> to vector<16x4xbf16>
    %187 = vector.extract_strided_slice %176 {offsets = [5, 0, 0], sizes = [1, 16, 4], strides = [1, 1, 1]} : vector<8x16x4xbf16> to vector<1x16x4xbf16>
    %188 = vector.shape_cast %187 : vector<1x16x4xbf16> to vector<16x4xbf16>
    %189 = vector.extract_strided_slice %176 {offsets = [6, 0, 0], sizes = [1, 16, 4], strides = [1, 1, 1]} : vector<8x16x4xbf16> to vector<1x16x4xbf16>
    %190 = vector.shape_cast %189 : vector<1x16x4xbf16> to vector<16x4xbf16>
    %191 = vector.extract_strided_slice %176 {offsets = [7, 0, 0], sizes = [1, 16, 4], strides = [1, 1, 1]} : vector<8x16x4xbf16> to vector<1x16x4xbf16>
    %192 = vector.shape_cast %191 : vector<1x16x4xbf16> to vector<16x4xbf16>
    %193 = tpu.concatenate %178, %180, %182, %184, %186, %188, %190, %192 in 0 : vector<16x4xbf16>, vector<16x4xbf16>, vector<16x4xbf16>, vector<16x4xbf16>, vector<16x4xbf16>, vector<16x4xbf16>, vector<16x4xbf16>, vector<16x4xbf16> -> vector<128x4xbf16>
    %194 = tpu.concatenate %25, %46, %67, %88, %109, %130, %151, %172, %193 in 1 : vector<128x4xbf16>, vector<128x4xbf16>, vector<128x4xbf16>, vector<128x4xbf16>, vector<128x4xbf16>, vector<128x4xbf16>, vector<128x4xbf16>, vector<128x4xbf16>, vector<128x4xbf16> -> vector<128x36xbf16>
    %cst_35 = arith.constant dense<0.000000e+00> : vector<128x128xf32>
    %195 = tpu.matmul %194, %0, %cst_35 {dimension_numbers = #tpu.dot_dimension_numbers<[1], [0], [0], [1], [0, 0, 1, 1], [], []>} : vector<128x36xbf16>, vector<36x128xbf16>, vector<128x128xf32> -> vector<128x128xf32>
    %196 = vector.broadcast %1 : vector<1x128xf32> to vector<128x128xf32>
    %197 = arith.addf %195, %196 : vector<128x128xf32>
    %cst_36 = arith.constant 0.000000e+00 : f32
    %198 = vector.broadcast %cst_36 : f32 to vector<128x128xf32>
    %199 = arith.maximumf %197, %198 : vector<128x128xf32>
    %200 = arith.addf %2, %199 : vector<128x128xf32>
    %c1_i32_37 = arith.constant 1 : i32
    %c8_i32_38 = arith.constant 8 : i32
    %201 = arith.muli %c1_i32_37, %c8_i32_38 : i32
    %202 = tpu.assume_multiple %201, 8 : i32
    %c0_i32_39 = arith.constant 0 : i32
    %203 = arith.addi %202, %c0_i32_39 : i32
    %c0_40 = arith.constant 0 : index
    %204 = arith.index_cast %203 : i32 to index
    %c0_41 = arith.constant 0 : index
    %c0_42 = arith.constant 0 : index
    %205 = vector.load %arg1[%c0_40, %204, %c0_41, %c0_42] : memref<1x18x18x4xbf16, #tpu.memory_space<vmem>>, vector<1x8x16x4xbf16>
    %206 = vector.shape_cast %205 : vector<1x8x16x4xbf16> to vector<8x16x4xbf16>
    %207 = vector.extract_strided_slice %206 {offsets = [0, 0, 0], sizes = [1, 16, 4], strides = [1, 1, 1]} : vector<8x16x4xbf16> to vector<1x16x4xbf16>
    %208 = vector.shape_cast %207 : vector<1x16x4xbf16> to vector<16x4xbf16>
    %209 = vector.extract_strided_slice %206 {offsets = [1, 0, 0], sizes = [1, 16, 4], strides = [1, 1, 1]} : vector<8x16x4xbf16> to vector<1x16x4xbf16>
    %210 = vector.shape_cast %209 : vector<1x16x4xbf16> to vector<16x4xbf16>
    %211 = vector.extract_strided_slice %206 {offsets = [2, 0, 0], sizes = [1, 16, 4], strides = [1, 1, 1]} : vector<8x16x4xbf16> to vector<1x16x4xbf16>
    %212 = vector.shape_cast %211 : vector<1x16x4xbf16> to vector<16x4xbf16>
    %213 = vector.extract_strided_slice %206 {offsets = [3, 0, 0], sizes = [1, 16, 4], strides = [1, 1, 1]} : vector<8x16x4xbf16> to vector<1x16x4xbf16>
    %214 = vector.shape_cast %213 : vector<1x16x4xbf16> to vector<16x4xbf16>
    %215 = vector.extract_strided_slice %206 {offsets = [4, 0, 0], sizes = [1, 16, 4], strides = [1, 1, 1]} : vector<8x16x4xbf16> to vector<1x16x4xbf16>
    %216 = vector.shape_cast %215 : vector<1x16x4xbf16> to vector<16x4xbf16>
    %217 = vector.extract_strided_slice %206 {offsets = [5, 0, 0], sizes = [1, 16, 4], strides = [1, 1, 1]} : vector<8x16x4xbf16> to vector<1x16x4xbf16>
    %218 = vector.shape_cast %217 : vector<1x16x4xbf16> to vector<16x4xbf16>
    %219 = vector.extract_strided_slice %206 {offsets = [6, 0, 0], sizes = [1, 16, 4], strides = [1, 1, 1]} : vector<8x16x4xbf16> to vector<1x16x4xbf16>
    %220 = vector.shape_cast %219 : vector<1x16x4xbf16> to vector<16x4xbf16>
    %221 = vector.extract_strided_slice %206 {offsets = [7, 0, 0], sizes = [1, 16, 4], strides = [1, 1, 1]} : vector<8x16x4xbf16> to vector<1x16x4xbf16>
    %222 = vector.shape_cast %221 : vector<1x16x4xbf16> to vector<16x4xbf16>
    %223 = tpu.concatenate %208, %210, %212, %214, %216, %218, %220, %222 in 0 : vector<16x4xbf16>, vector<16x4xbf16>, vector<16x4xbf16>, vector<16x4xbf16>, vector<16x4xbf16>, vector<16x4xbf16>, vector<16x4xbf16>, vector<16x4xbf16> -> vector<128x4xbf16>
    %c0_i32_43 = arith.constant 0 : i32
    %224 = arith.addi %202, %c0_i32_43 : i32
    %c0_44 = arith.constant 0 : index
    %225 = arith.index_cast %224 : i32 to index
    %c1_45 = arith.constant 1 : index
    %c0_46 = arith.constant 0 : index
    %226 = vector.load %arg1[%c0_44, %225, %c1_45, %c0_46] : memref<1x18x18x4xbf16, #tpu.memory_space<vmem>>, vector<1x8x16x4xbf16>
    %227 = vector.shape_cast %226 : vector<1x8x16x4xbf16> to vector<8x16x4xbf16>
    %228 = vector.extract_strided_slice %227 {offsets = [0, 0, 0], sizes = [1, 16, 4], strides = [1, 1, 1]} : vector<8x16x4xbf16> to vector<1x16x4xbf16>
    %229 = vector.shape_cast %228 : vector<1x16x4xbf16> to vector<16x4xbf16>
    %230 = vector.extract_strided_slice %227 {offsets = [1, 0, 0], sizes = [1, 16, 4], strides = [1, 1, 1]} : vector<8x16x4xbf16> to vector<1x16x4xbf16>
    %231 = vector.shape_cast %230 : vector<1x16x4xbf16> to vector<16x4xbf16>
    %232 = vector.extract_strided_slice %227 {offsets = [2, 0, 0], sizes = [1, 16, 4], strides = [1, 1, 1]} : vector<8x16x4xbf16> to vector<1x16x4xbf16>
    %233 = vector.shape_cast %232 : vector<1x16x4xbf16> to vector<16x4xbf16>
    %234 = vector.extract_strided_slice %227 {offsets = [3, 0, 0], sizes = [1, 16, 4], strides = [1, 1, 1]} : vector<8x16x4xbf16> to vector<1x16x4xbf16>
    %235 = vector.shape_cast %234 : vector<1x16x4xbf16> to vector<16x4xbf16>
    %236 = vector.extract_strided_slice %227 {offsets = [4, 0, 0], sizes = [1, 16, 4], strides = [1, 1, 1]} : vector<8x16x4xbf16> to vector<1x16x4xbf16>
    %237 = vector.shape_cast %236 : vector<1x16x4xbf16> to vector<16x4xbf16>
    %238 = vector.extract_strided_slice %227 {offsets = [5, 0, 0], sizes = [1, 16, 4], strides = [1, 1, 1]} : vector<8x16x4xbf16> to vector<1x16x4xbf16>
    %239 = vector.shape_cast %238 : vector<1x16x4xbf16> to vector<16x4xbf16>
    %240 = vector.extract_strided_slice %227 {offsets = [6, 0, 0], sizes = [1, 16, 4], strides = [1, 1, 1]} : vector<8x16x4xbf16> to vector<1x16x4xbf16>
    %241 = vector.shape_cast %240 : vector<1x16x4xbf16> to vector<16x4xbf16>
    %242 = vector.extract_strided_slice %227 {offsets = [7, 0, 0], sizes = [1, 16, 4], strides = [1, 1, 1]} : vector<8x16x4xbf16> to vector<1x16x4xbf16>
    %243 = vector.shape_cast %242 : vector<1x16x4xbf16> to vector<16x4xbf16>
    %244 = tpu.concatenate %229, %231, %233, %235, %237, %239, %241, %243 in 0 : vector<16x4xbf16>, vector<16x4xbf16>, vector<16x4xbf16>, vector<16x4xbf16>, vector<16x4xbf16>, vector<16x4xbf16>, vector<16x4xbf16>, vector<16x4xbf16> -> vector<128x4xbf16>
    %c0_i32_47 = arith.constant 0 : i32
    %245 = arith.addi %202, %c0_i32_47 : i32
    %c0_48 = arith.constant 0 : index
    %246 = arith.index_cast %245 : i32 to index
    %c2_49 = arith.constant 2 : index
    %c0_50 = arith.constant 0 : index
    %247 = vector.load %arg1[%c0_48, %246, %c2_49, %c0_50] : memref<1x18x18x4xbf16, #tpu.memory_space<vmem>>, vector<1x8x16x4xbf16>
    %248 = vector.shape_cast %247 : vector<1x8x16x4xbf16> to vector<8x16x4xbf16>
    %249 = vector.extract_strided_slice %248 {offsets = [0, 0, 0], sizes = [1, 16, 4], strides = [1, 1, 1]} : vector<8x16x4xbf16> to vector<1x16x4xbf16>
    %250 = vector.shape_cast %249 : vector<1x16x4xbf16> to vector<16x4xbf16>
    %251 = vector.extract_strided_slice %248 {offsets = [1, 0, 0], sizes = [1, 16, 4], strides = [1, 1, 1]} : vector<8x16x4xbf16> to vector<1x16x4xbf16>
    %252 = vector.shape_cast %251 : vector<1x16x4xbf16> to vector<16x4xbf16>
    %253 = vector.extract_strided_slice %248 {offsets = [2, 0, 0], sizes = [1, 16, 4], strides = [1, 1, 1]} : vector<8x16x4xbf16> to vector<1x16x4xbf16>
    %254 = vector.shape_cast %253 : vector<1x16x4xbf16> to vector<16x4xbf16>
    %255 = vector.extract_strided_slice %248 {offsets = [3, 0, 0], sizes = [1, 16, 4], strides = [1, 1, 1]} : vector<8x16x4xbf16> to vector<1x16x4xbf16>
    %256 = vector.shape_cast %255 : vector<1x16x4xbf16> to vector<16x4xbf16>
    %257 = vector.extract_strided_slice %248 {offsets = [4, 0, 0], sizes = [1, 16, 4], strides = [1, 1, 1]} : vector<8x16x4xbf16> to vector<1x16x4xbf16>
    %258 = vector.shape_cast %257 : vector<1x16x4xbf16> to vector<16x4xbf16>
    %259 = vector.extract_strided_slice %248 {offsets = [5, 0, 0], sizes = [1, 16, 4], strides = [1, 1, 1]} : vector<8x16x4xbf16> to vector<1x16x4xbf16>
    %260 = vector.shape_cast %259 : vector<1x16x4xbf16> to vector<16x4xbf16>
    %261 = vector.extract_strided_slice %248 {offsets = [6, 0, 0], sizes = [1, 16, 4], strides = [1, 1, 1]} : vector<8x16x4xbf16> to vector<1x16x4xbf16>
    %262 = vector.shape_cast %261 : vector<1x16x4xbf16> to vector<16x4xbf16>
    %263 = vector.extract_strided_slice %248 {offsets = [7, 0, 0], sizes = [1, 16, 4], strides = [1, 1, 1]} : vector<8x16x4xbf16> to vector<1x16x4xbf16>
    %264 = vector.shape_cast %263 : vector<1x16x4xbf16> to vector<16x4xbf16>
    %265 = tpu.concatenate %250, %252, %254, %256, %258, %260, %262, %264 in 0 : vector<16x4xbf16>, vector<16x4xbf16>, vector<16x4xbf16>, vector<16x4xbf16>, vector<16x4xbf16>, vector<16x4xbf16>, vector<16x4xbf16>, vector<16x4xbf16> -> vector<128x4xbf16>
    %c1_i32_51 = arith.constant 1 : i32
    %266 = arith.addi %202, %c1_i32_51 : i32
    %c0_52 = arith.constant 0 : index
    %267 = arith.index_cast %266 : i32 to index
    %c0_53 = arith.constant 0 : index
    %c0_54 = arith.constant 0 : index
    %268 = vector.load %arg1[%c0_52, %267, %c0_53, %c0_54] : memref<1x18x18x4xbf16, #tpu.memory_space<vmem>>, vector<1x8x16x4xbf16>
    %269 = vector.shape_cast %268 : vector<1x8x16x4xbf16> to vector<8x16x4xbf16>
    %270 = vector.extract_strided_slice %269 {offsets = [0, 0, 0], sizes = [1, 16, 4], strides = [1, 1, 1]} : vector<8x16x4xbf16> to vector<1x16x4xbf16>
    %271 = vector.shape_cast %270 : vector<1x16x4xbf16> to vector<16x4xbf16>
    %272 = vector.extract_strided_slice %269 {offsets = [1, 0, 0], sizes = [1, 16, 4], strides = [1, 1, 1]} : vector<8x16x4xbf16> to vector<1x16x4xbf16>
    %273 = vector.shape_cast %272 : vector<1x16x4xbf16> to vector<16x4xbf16>
    %274 = vector.extract_strided_slice %269 {offsets = [2, 0, 0], sizes = [1, 16, 4], strides = [1, 1, 1]} : vector<8x16x4xbf16> to vector<1x16x4xbf16>
    %275 = vector.shape_cast %274 : vector<1x16x4xbf16> to vector<16x4xbf16>
    %276 = vector.extract_strided_slice %269 {offsets = [3, 0, 0], sizes = [1, 16, 4], strides = [1, 1, 1]} : vector<8x16x4xbf16> to vector<1x16x4xbf16>
    %277 = vector.shape_cast %276 : vector<1x16x4xbf16> to vector<16x4xbf16>
    %278 = vector.extract_strided_slice %269 {offsets = [4, 0, 0], sizes = [1, 16, 4], strides = [1, 1, 1]} : vector<8x16x4xbf16> to vector<1x16x4xbf16>
    %279 = vector.shape_cast %278 : vector<1x16x4xbf16> to vector<16x4xbf16>
    %280 = vector.extract_strided_slice %269 {offsets = [5, 0, 0], sizes = [1, 16, 4], strides = [1, 1, 1]} : vector<8x16x4xbf16> to vector<1x16x4xbf16>
    %281 = vector.shape_cast %280 : vector<1x16x4xbf16> to vector<16x4xbf16>
    %282 = vector.extract_strided_slice %269 {offsets = [6, 0, 0], sizes = [1, 16, 4], strides = [1, 1, 1]} : vector<8x16x4xbf16> to vector<1x16x4xbf16>
    %283 = vector.shape_cast %282 : vector<1x16x4xbf16> to vector<16x4xbf16>
    %284 = vector.extract_strided_slice %269 {offsets = [7, 0, 0], sizes = [1, 16, 4], strides = [1, 1, 1]} : vector<8x16x4xbf16> to vector<1x16x4xbf16>
    %285 = vector.shape_cast %284 : vector<1x16x4xbf16> to vector<16x4xbf16>
    %286 = tpu.concatenate %271, %273, %275, %277, %279, %281, %283, %285 in 0 : vector<16x4xbf16>, vector<16x4xbf16>, vector<16x4xbf16>, vector<16x4xbf16>, vector<16x4xbf16>, vector<16x4xbf16>, vector<16x4xbf16>, vector<16x4xbf16> -> vector<128x4xbf16>
    %c1_i32_55 = arith.constant 1 : i32
    %287 = arith.addi %202, %c1_i32_55 : i32
    %c0_56 = arith.constant 0 : index
    %288 = arith.index_cast %287 : i32 to index
    %c1_57 = arith.constant 1 : index
    %c0_58 = arith.constant 0 : index
    %289 = vector.load %arg1[%c0_56, %288, %c1_57, %c0_58] : memref<1x18x18x4xbf16, #tpu.memory_space<vmem>>, vector<1x8x16x4xbf16>
    %290 = vector.shape_cast %289 : vector<1x8x16x4xbf16> to vector<8x16x4xbf16>
    %291 = vector.extract_strided_slice %290 {offsets = [0, 0, 0], sizes = [1, 16, 4], strides = [1, 1, 1]} : vector<8x16x4xbf16> to vector<1x16x4xbf16>
    %292 = vector.shape_cast %291 : vector<1x16x4xbf16> to vector<16x4xbf16>
    %293 = vector.extract_strided_slice %290 {offsets = [1, 0, 0], sizes = [1, 16, 4], strides = [1, 1, 1]} : vector<8x16x4xbf16> to vector<1x16x4xbf16>
    %294 = vector.shape_cast %293 : vector<1x16x4xbf16> to vector<16x4xbf16>
    %295 = vector.extract_strided_slice %290 {offsets = [2, 0, 0], sizes = [1, 16, 4], strides = [1, 1, 1]} : vector<8x16x4xbf16> to vector<1x16x4xbf16>
    %296 = vector.shape_cast %295 : vector<1x16x4xbf16> to vector<16x4xbf16>
    %297 = vector.extract_strided_slice %290 {offsets = [3, 0, 0], sizes = [1, 16, 4], strides = [1, 1, 1]} : vector<8x16x4xbf16> to vector<1x16x4xbf16>
    %298 = vector.shape_cast %297 : vector<1x16x4xbf16> to vector<16x4xbf16>
    %299 = vector.extract_strided_slice %290 {offsets = [4, 0, 0], sizes = [1, 16, 4], strides = [1, 1, 1]} : vector<8x16x4xbf16> to vector<1x16x4xbf16>
    %300 = vector.shape_cast %299 : vector<1x16x4xbf16> to vector<16x4xbf16>
    %301 = vector.extract_strided_slice %290 {offsets = [5, 0, 0], sizes = [1, 16, 4], strides = [1, 1, 1]} : vector<8x16x4xbf16> to vector<1x16x4xbf16>
    %302 = vector.shape_cast %301 : vector<1x16x4xbf16> to vector<16x4xbf16>
    %303 = vector.extract_strided_slice %290 {offsets = [6, 0, 0], sizes = [1, 16, 4], strides = [1, 1, 1]} : vector<8x16x4xbf16> to vector<1x16x4xbf16>
    %304 = vector.shape_cast %303 : vector<1x16x4xbf16> to vector<16x4xbf16>
    %305 = vector.extract_strided_slice %290 {offsets = [7, 0, 0], sizes = [1, 16, 4], strides = [1, 1, 1]} : vector<8x16x4xbf16> to vector<1x16x4xbf16>
    %306 = vector.shape_cast %305 : vector<1x16x4xbf16> to vector<16x4xbf16>
    %307 = tpu.concatenate %292, %294, %296, %298, %300, %302, %304, %306 in 0 : vector<16x4xbf16>, vector<16x4xbf16>, vector<16x4xbf16>, vector<16x4xbf16>, vector<16x4xbf16>, vector<16x4xbf16>, vector<16x4xbf16>, vector<16x4xbf16> -> vector<128x4xbf16>
    %c1_i32_59 = arith.constant 1 : i32
    %308 = arith.addi %202, %c1_i32_59 : i32
    %c0_60 = arith.constant 0 : index
    %309 = arith.index_cast %308 : i32 to index
    %c2_61 = arith.constant 2 : index
    %c0_62 = arith.constant 0 : index
    %310 = vector.load %arg1[%c0_60, %309, %c2_61, %c0_62] : memref<1x18x18x4xbf16, #tpu.memory_space<vmem>>, vector<1x8x16x4xbf16>
    %311 = vector.shape_cast %310 : vector<1x8x16x4xbf16> to vector<8x16x4xbf16>
    %312 = vector.extract_strided_slice %311 {offsets = [0, 0, 0], sizes = [1, 16, 4], strides = [1, 1, 1]} : vector<8x16x4xbf16> to vector<1x16x4xbf16>
    %313 = vector.shape_cast %312 : vector<1x16x4xbf16> to vector<16x4xbf16>
    %314 = vector.extract_strided_slice %311 {offsets = [1, 0, 0], sizes = [1, 16, 4], strides = [1, 1, 1]} : vector<8x16x4xbf16> to vector<1x16x4xbf16>
    %315 = vector.shape_cast %314 : vector<1x16x4xbf16> to vector<16x4xbf16>
    %316 = vector.extract_strided_slice %311 {offsets = [2, 0, 0], sizes = [1, 16, 4], strides = [1, 1, 1]} : vector<8x16x4xbf16> to vector<1x16x4xbf16>
    %317 = vector.shape_cast %316 : vector<1x16x4xbf16> to vector<16x4xbf16>
    %318 = vector.extract_strided_slice %311 {offsets = [3, 0, 0], sizes = [1, 16, 4], strides = [1, 1, 1]} : vector<8x16x4xbf16> to vector<1x16x4xbf16>
    %319 = vector.shape_cast %318 : vector<1x16x4xbf16> to vector<16x4xbf16>
    %320 = vector.extract_strided_slice %311 {offsets = [4, 0, 0], sizes = [1, 16, 4], strides = [1, 1, 1]} : vector<8x16x4xbf16> to vector<1x16x4xbf16>
    %321 = vector.shape_cast %320 : vector<1x16x4xbf16> to vector<16x4xbf16>
    %322 = vector.extract_strided_slice %311 {offsets = [5, 0, 0], sizes = [1, 16, 4], strides = [1, 1, 1]} : vector<8x16x4xbf16> to vector<1x16x4xbf16>
    %323 = vector.shape_cast %322 : vector<1x16x4xbf16> to vector<16x4xbf16>
    %324 = vector.extract_strided_slice %311 {offsets = [6, 0, 0], sizes = [1, 16, 4], strides = [1, 1, 1]} : vector<8x16x4xbf16> to vector<1x16x4xbf16>
    %325 = vector.shape_cast %324 : vector<1x16x4xbf16> to vector<16x4xbf16>
    %326 = vector.extract_strided_slice %311 {offsets = [7, 0, 0], sizes = [1, 16, 4], strides = [1, 1, 1]} : vector<8x16x4xbf16> to vector<1x16x4xbf16>
    %327 = vector.shape_cast %326 : vector<1x16x4xbf16> to vector<16x4xbf16>
    %328 = tpu.concatenate %313, %315, %317, %319, %321, %323, %325, %327 in 0 : vector<16x4xbf16>, vector<16x4xbf16>, vector<16x4xbf16>, vector<16x4xbf16>, vector<16x4xbf16>, vector<16x4xbf16>, vector<16x4xbf16>, vector<16x4xbf16> -> vector<128x4xbf16>
    %c2_i32_63 = arith.constant 2 : i32
    %329 = arith.addi %202, %c2_i32_63 : i32
    %c0_64 = arith.constant 0 : index
    %330 = arith.index_cast %329 : i32 to index
    %c0_65 = arith.constant 0 : index
    %c0_66 = arith.constant 0 : index
    %331 = vector.load %arg1[%c0_64, %330, %c0_65, %c0_66] : memref<1x18x18x4xbf16, #tpu.memory_space<vmem>>, vector<1x8x16x4xbf16>
    %332 = vector.shape_cast %331 : vector<1x8x16x4xbf16> to vector<8x16x4xbf16>
    %333 = vector.extract_strided_slice %332 {offsets = [0, 0, 0], sizes = [1, 16, 4], strides = [1, 1, 1]} : vector<8x16x4xbf16> to vector<1x16x4xbf16>
    %334 = vector.shape_cast %333 : vector<1x16x4xbf16> to vector<16x4xbf16>
    %335 = vector.extract_strided_slice %332 {offsets = [1, 0, 0], sizes = [1, 16, 4], strides = [1, 1, 1]} : vector<8x16x4xbf16> to vector<1x16x4xbf16>
    %336 = vector.shape_cast %335 : vector<1x16x4xbf16> to vector<16x4xbf16>
    %337 = vector.extract_strided_slice %332 {offsets = [2, 0, 0], sizes = [1, 16, 4], strides = [1, 1, 1]} : vector<8x16x4xbf16> to vector<1x16x4xbf16>
    %338 = vector.shape_cast %337 : vector<1x16x4xbf16> to vector<16x4xbf16>
    %339 = vector.extract_strided_slice %332 {offsets = [3, 0, 0], sizes = [1, 16, 4], strides = [1, 1, 1]} : vector<8x16x4xbf16> to vector<1x16x4xbf16>
    %340 = vector.shape_cast %339 : vector<1x16x4xbf16> to vector<16x4xbf16>
    %341 = vector.extract_strided_slice %332 {offsets = [4, 0, 0], sizes = [1, 16, 4], strides = [1, 1, 1]} : vector<8x16x4xbf16> to vector<1x16x4xbf16>
    %342 = vector.shape_cast %341 : vector<1x16x4xbf16> to vector<16x4xbf16>
    %343 = vector.extract_strided_slice %332 {offsets = [5, 0, 0], sizes = [1, 16, 4], strides = [1, 1, 1]} : vector<8x16x4xbf16> to vector<1x16x4xbf16>
    %344 = vector.shape_cast %343 : vector<1x16x4xbf16> to vector<16x4xbf16>
    %345 = vector.extract_strided_slice %332 {offsets = [6, 0, 0], sizes = [1, 16, 4], strides = [1, 1, 1]} : vector<8x16x4xbf16> to vector<1x16x4xbf16>
    %346 = vector.shape_cast %345 : vector<1x16x4xbf16> to vector<16x4xbf16>
    %347 = vector.extract_strided_slice %332 {offsets = [7, 0, 0], sizes = [1, 16, 4], strides = [1, 1, 1]} : vector<8x16x4xbf16> to vector<1x16x4xbf16>
    %348 = vector.shape_cast %347 : vector<1x16x4xbf16> to vector<16x4xbf16>
    %349 = tpu.concatenate %334, %336, %338, %340, %342, %344, %346, %348 in 0 : vector<16x4xbf16>, vector<16x4xbf16>, vector<16x4xbf16>, vector<16x4xbf16>, vector<16x4xbf16>, vector<16x4xbf16>, vector<16x4xbf16>, vector<16x4xbf16> -> vector<128x4xbf16>
    %c2_i32_67 = arith.constant 2 : i32
    %350 = arith.addi %202, %c2_i32_67 : i32
    %c0_68 = arith.constant 0 : index
    %351 = arith.index_cast %350 : i32 to index
    %c1_69 = arith.constant 1 : index
    %c0_70 = arith.constant 0 : index
    %352 = vector.load %arg1[%c0_68, %351, %c1_69, %c0_70] : memref<1x18x18x4xbf16, #tpu.memory_space<vmem>>, vector<1x8x16x4xbf16>
    %353 = vector.shape_cast %352 : vector<1x8x16x4xbf16> to vector<8x16x4xbf16>
    %354 = vector.extract_strided_slice %353 {offsets = [0, 0, 0], sizes = [1, 16, 4], strides = [1, 1, 1]} : vector<8x16x4xbf16> to vector<1x16x4xbf16>
    %355 = vector.shape_cast %354 : vector<1x16x4xbf16> to vector<16x4xbf16>
    %356 = vector.extract_strided_slice %353 {offsets = [1, 0, 0], sizes = [1, 16, 4], strides = [1, 1, 1]} : vector<8x16x4xbf16> to vector<1x16x4xbf16>
    %357 = vector.shape_cast %356 : vector<1x16x4xbf16> to vector<16x4xbf16>
    %358 = vector.extract_strided_slice %353 {offsets = [2, 0, 0], sizes = [1, 16, 4], strides = [1, 1, 1]} : vector<8x16x4xbf16> to vector<1x16x4xbf16>
    %359 = vector.shape_cast %358 : vector<1x16x4xbf16> to vector<16x4xbf16>
    %360 = vector.extract_strided_slice %353 {offsets = [3, 0, 0], sizes = [1, 16, 4], strides = [1, 1, 1]} : vector<8x16x4xbf16> to vector<1x16x4xbf16>
    %361 = vector.shape_cast %360 : vector<1x16x4xbf16> to vector<16x4xbf16>
    %362 = vector.extract_strided_slice %353 {offsets = [4, 0, 0], sizes = [1, 16, 4], strides = [1, 1, 1]} : vector<8x16x4xbf16> to vector<1x16x4xbf16>
    %363 = vector.shape_cast %362 : vector<1x16x4xbf16> to vector<16x4xbf16>
    %364 = vector.extract_strided_slice %353 {offsets = [5, 0, 0], sizes = [1, 16, 4], strides = [1, 1, 1]} : vector<8x16x4xbf16> to vector<1x16x4xbf16>
    %365 = vector.shape_cast %364 : vector<1x16x4xbf16> to vector<16x4xbf16>
    %366 = vector.extract_strided_slice %353 {offsets = [6, 0, 0], sizes = [1, 16, 4], strides = [1, 1, 1]} : vector<8x16x4xbf16> to vector<1x16x4xbf16>
    %367 = vector.shape_cast %366 : vector<1x16x4xbf16> to vector<16x4xbf16>
    %368 = vector.extract_strided_slice %353 {offsets = [7, 0, 0], sizes = [1, 16, 4], strides = [1, 1, 1]} : vector<8x16x4xbf16> to vector<1x16x4xbf16>
    %369 = vector.shape_cast %368 : vector<1x16x4xbf16> to vector<16x4xbf16>
    %370 = tpu.concatenate %355, %357, %359, %361, %363, %365, %367, %369 in 0 : vector<16x4xbf16>, vector<16x4xbf16>, vector<16x4xbf16>, vector<16x4xbf16>, vector<16x4xbf16>, vector<16x4xbf16>, vector<16x4xbf16>, vector<16x4xbf16> -> vector<128x4xbf16>
    %c2_i32_71 = arith.constant 2 : i32
    %371 = arith.addi %202, %c2_i32_71 : i32
    %c0_72 = arith.constant 0 : index
    %372 = arith.index_cast %371 : i32 to index
    %c2_73 = arith.constant 2 : index
    %c0_74 = arith.constant 0 : index
    %373 = vector.load %arg1[%c0_72, %372, %c2_73, %c0_74] : memref<1x18x18x4xbf16, #tpu.memory_space<vmem>>, vector<1x8x16x4xbf16>
    %374 = vector.shape_cast %373 : vector<1x8x16x4xbf16> to vector<8x16x4xbf16>
    %375 = vector.extract_strided_slice %374 {offsets = [0, 0, 0], sizes = [1, 16, 4], strides = [1, 1, 1]} : vector<8x16x4xbf16> to vector<1x16x4xbf16>
    %376 = vector.shape_cast %375 : vector<1x16x4xbf16> to vector<16x4xbf16>
    %377 = vector.extract_strided_slice %374 {offsets = [1, 0, 0], sizes = [1, 16, 4], strides = [1, 1, 1]} : vector<8x16x4xbf16> to vector<1x16x4xbf16>
    %378 = vector.shape_cast %377 : vector<1x16x4xbf16> to vector<16x4xbf16>
    %379 = vector.extract_strided_slice %374 {offsets = [2, 0, 0], sizes = [1, 16, 4], strides = [1, 1, 1]} : vector<8x16x4xbf16> to vector<1x16x4xbf16>
    %380 = vector.shape_cast %379 : vector<1x16x4xbf16> to vector<16x4xbf16>
    %381 = vector.extract_strided_slice %374 {offsets = [3, 0, 0], sizes = [1, 16, 4], strides = [1, 1, 1]} : vector<8x16x4xbf16> to vector<1x16x4xbf16>
    %382 = vector.shape_cast %381 : vector<1x16x4xbf16> to vector<16x4xbf16>
    %383 = vector.extract_strided_slice %374 {offsets = [4, 0, 0], sizes = [1, 16, 4], strides = [1, 1, 1]} : vector<8x16x4xbf16> to vector<1x16x4xbf16>
    %384 = vector.shape_cast %383 : vector<1x16x4xbf16> to vector<16x4xbf16>
    %385 = vector.extract_strided_slice %374 {offsets = [5, 0, 0], sizes = [1, 16, 4], strides = [1, 1, 1]} : vector<8x16x4xbf16> to vector<1x16x4xbf16>
    %386 = vector.shape_cast %385 : vector<1x16x4xbf16> to vector<16x4xbf16>
    %387 = vector.extract_strided_slice %374 {offsets = [6, 0, 0], sizes = [1, 16, 4], strides = [1, 1, 1]} : vector<8x16x4xbf16> to vector<1x16x4xbf16>
    %388 = vector.shape_cast %387 : vector<1x16x4xbf16> to vector<16x4xbf16>
    %389 = vector.extract_strided_slice %374 {offsets = [7, 0, 0], sizes = [1, 16, 4], strides = [1, 1, 1]} : vector<8x16x4xbf16> to vector<1x16x4xbf16>
    %390 = vector.shape_cast %389 : vector<1x16x4xbf16> to vector<16x4xbf16>
    %391 = tpu.concatenate %376, %378, %380, %382, %384, %386, %388, %390 in 0 : vector<16x4xbf16>, vector<16x4xbf16>, vector<16x4xbf16>, vector<16x4xbf16>, vector<16x4xbf16>, vector<16x4xbf16>, vector<16x4xbf16>, vector<16x4xbf16> -> vector<128x4xbf16>
    %392 = tpu.concatenate %223, %244, %265, %286, %307, %328, %349, %370, %391 in 1 : vector<128x4xbf16>, vector<128x4xbf16>, vector<128x4xbf16>, vector<128x4xbf16>, vector<128x4xbf16>, vector<128x4xbf16>, vector<128x4xbf16>, vector<128x4xbf16>, vector<128x4xbf16> -> vector<128x36xbf16>
    %cst_75 = arith.constant dense<0.000000e+00> : vector<128x128xf32>
    %393 = tpu.matmul %392, %0, %cst_75 {dimension_numbers = #tpu.dot_dimension_numbers<[1], [0], [0], [1], [0, 0, 1, 1], [], []>} : vector<128x36xbf16>, vector<36x128xbf16>, vector<128x128xf32> -> vector<128x128xf32>
    %394 = vector.broadcast %1 : vector<1x128xf32> to vector<128x128xf32>
    %395 = arith.addf %393, %394 : vector<128x128xf32>
    %cst_76 = arith.constant 0.000000e+00 : f32
    %396 = vector.broadcast %cst_76 : f32 to vector<128x128xf32>
    %397 = arith.maximumf %395, %396 : vector<128x128xf32>
    %398 = arith.addf %200, %397 : vector<128x128xf32>
    %c2_i32_77 = arith.constant 2 : i32
    %cst_78 = arith.constant dense<0.000000e+00> : vector<128xf32>
    %399 = vector.multi_reduction <add>, %398, %cst_78 [0] : vector<128x128xf32> to vector<128xf32>
    %400 = vector.shape_cast %399 : vector<128xf32> to vector<1x128xf32>
    %cst_79 = arith.constant 3.906250e-03 : f32
    %401 = vector.broadcast %cst_79 : f32 to vector<1x128xf32>
    %402 = arith.mulf %400, %401 : vector<1x128xf32>
    %c0_80 = arith.constant 0 : index
    %c0_81 = arith.constant 0 : index
    %c0_82 = arith.constant 0 : index
    %403 = vector.load %arg4[%c0_80, %c0_81, %c0_82] : memref<1x1x128xf32, #tpu.memory_space<vmem>>, vector<1x1x128xf32>
    %404 = vector.shape_cast %403 : vector<1x1x128xf32> to vector<1x128xf32>
    %405 = vector.shape_cast %402 : vector<1x128xf32> to vector<1x1x128xf32>
    tpu.vector_store %arg4[%c0_80, %c0_81, %c0_82], %405 {strides = array<i32>} : memref<1x1x128xf32, #tpu.memory_space<vmem>>, vector<1x1x128xf32>,
    return
  }
  func.func @transform_0(%arg0: i32) -> (i32, i32, i32, i32) {
    %c0_i32 = arith.constant 0 : i32
    %c0_i32_0 = arith.constant 0 : i32
    %c0_i32_1 = arith.constant 0 : i32
    %c0_i32_2 = arith.constant 0 : i32
    return %arg0, %c0_i32, %c0_i32_0, %c0_i32_1 : i32, i32, i32, i32
  }
  func.func @transform_1(%arg0: i32) -> (i32, i32) {
    %c0_i32 = arith.constant 0 : i32
    %c0_i32_0 = arith.constant 0 : i32
    %c0_i32_1 = arith.constant 0 : i32
    return %c0_i32, %c0_i32_0 : i32, i32
  }
  func.func @transform_2(%arg0: i32) -> (i32, i32) {
    %c0_i32 = arith.constant 0 : i32
    %c0_i32_0 = arith.constant 0 : i32
    %c0_i32_1 = arith.constant 0 : i32
    return %c0_i32, %c0_i32_0 : i32, i32
  }
  func.func @transform_3(%arg0: i32) -> (i32, i32, i32) {
    %c0_i32 = arith.constant 0 : i32
    %c0_i32_0 = arith.constant 0 : i32
    %c0_i32_1 = arith.constant 0 : i32
    return %arg0, %c0_i32, %c0_i32_0 : i32, i32, i32
  }
}

</mosaic_0001>

<llo_original>
// kernel: tpu_custom_call.1
$region0: #{tpu_custom_call.1}
  #allocation0 [shape = 'u32[]', space=smem, size = 0x4, offset = 0x4, fixed_abs, tag = 'smem constant byte address 0x4 - core index']
  #allocation1 [shape = 'u32[144,128]{1,0:T(1,128)}', space=vmem, size = 0x12000, scoped, tag = 'internal scratch']
  %s0 = inlined_call_operand.vmem [shape: bf16[2,18,18,4], index: 0, kind: input, shape index: {}]
  %s1 = inlined_call_operand.vmem [shape: bf16[36,128], index: 1, kind: input, shape index: {}]
  %s2 = inlined_call_operand.vmem [shape: f32[1,128], index: 2, kind: input, shape index: {}]
  %s3 = inlined_call_operand.hbm [shape: f32[2,1,128], index: 3, kind: output, shape index: {}]
  %s4 = sld [smem:[#allocation0]]
  $region45: #{tpu_custom_call.1} parent=0
    _
  %s6 = ssub.s32 1, %s4
  %s7 = scalar_select 0, %s6, %s4
  $region1: #{tpu_custom_call.1} parent=0
    #allocation2 [shape = 'u8[1024]{0}', space=vmem, size = 0x400, scoped, tag = 'output window, operand 0']
    #allocation3 [shape = 's32[2]{0}', space=sflag, size = 0x8, scoped, tag = 'scoped memory for tpu_custom_call.1']
    %8 = vsyncpa [#allocation3], 0
    %s9 = scalar_lea.sflag [#allocation3], 1
    %10 = vsyncpa %s9, 0
    loop: start=0, step=1, limit=4
    $region2: #{tpu_custom_call.1} parent=1 // loop_pre_header
      _
    $region3: #{tpu_custom_call.1} parent=1 // loop_header
      %s12 = sphi 0, %s16
      %p13 = scmp.ge.s32.totalorder %s12, 4
      %s22 = sphi 0, %s24
      %s25 = sphi 0, %s22
      %s26 = sphi 0, %s25
      %s42 = sphi 0, %s26
      %s46 = sphi 0, %s46
      %s48 = sphi 0, %s46
      %s49 = sphi 0, %s48
      %s63 = sphi 0, %s49
      %s67 = sphi 0, %s67
      %s69 = sphi 0, %s67
      %s70 = sphi 0, %s69
      %s84 = sphi 0, %s70
      %s90 = sphi 0, %s92
      %s93 = sphi 0, %s90
      %s94 = sphi 0, %s93
      %s110 = sphi 0, %s94
    $region4: #{tpu_custom_call.1} parent=1 // loop_header_branch
      %15 = sbr.rel (%p13) target = $region8
    $region5: #{tpu_custom_call.1} parent=1 // loop_body
      %s17 = ssub.s32 %s12, 1
      %s18 = ssub.s32 %s12, 2
      %s19 = sadd.s32 %s12, 1
      %s20 = ssub.s32 %s12, %s19
      %p21 = scmp.eq.s32.totalorder %s20, 0
      %s23 = sadd.s32 %s22, 1
      %s24 = scalar_select %p21, %s22, %s23
      %p27 = pneg %p21
      %p28 = scmp.eq.s32.totalorder %s12, 1
      %p29 = por %p27, %p28
      %p30 = scmp.ne.s32.totalorder %s22, %s25
      %p31 = scmp.eq.s32.totalorder %s12, 0
      %p32 = por %p30, %p31
      %p33 = scmp.ne.s32.totalorder %s22, %s25
      %p34 = scmp.eq.s32.totalorder %s17, 1
      %p35 = por %p33, %p34
      %p36 = scmp.ne.s32.totalorder %s25, %s26
      %p37 = scmp.eq.s32.totalorder %s17, 0
      %p38 = por %p36, %p37
      %p39 = scmp.ne.s32.totalorder %s25, %s26
      %p40 = scmp.eq.s32.totalorder %s18, 1
      %p41 = por %p39, %p40
      %p43 = scmp.ne.s32.totalorder %s26, %s42
      %p44 = scmp.eq.s32.totalorder %s18, 0
      %p45 = por %p43, %p44
      %s47 = sadd.s32 %s46, 1
      %p50 = scmp.eq.s32.totalorder %s12, 1
      %p51 = scmp.ne.s32.totalorder %s46, %s48
      %p52 = scmp.eq.s32.totalorder %s12, 0
      %p53 = por %p51, %p52
      %p54 = scmp.ne.s32.totalorder %s46, %s48
      %p55 = scmp.eq.s32.totalorder %s17, 1
      %p56 = por %p54, %p55
      %p57 = scmp.ne.s32.totalorder %s48, %s49
      %p58 = scmp.eq.s32.totalorder %s17, 0
      %p59 = por %p57, %p58
      %p60 = scmp.ne.s32.totalorder %s48, %s49
      %p61 = scmp.eq.s32.totalorder %s18, 1
      %p62 = por %p60, %p61
      %p64 = scmp.ne.s32.totalorder %s49, %s63
      %p65 = scmp.eq.s32.totalorder %s18, 0
      %p66 = por %p64, %p65
      %s68 = sadd.s32 %s67, 1
      %p71 = scmp.eq.s32.totalorder %s12, 1
      %p72 = scmp.ne.s32.totalorder %s67, %s69
      %p73 = scmp.eq.s32.totalorder %s12, 0
      %p74 = por %p72, %p73
      %p75 = scmp.ne.s32.totalorder %s67, %s69
      %p76 = scmp.eq.s32.totalorder %s17, 1
      %p77 = por %p75, %p76
      %p78 = scmp.ne.s32.totalorder %s69, %s70
      %p79 = scmp.eq.s32.totalorder %s17, 0
      %p80 = por %p78, %p79
      %p81 = scmp.ne.s32.totalorder %s69, %s70
      %p82 = scmp.eq.s32.totalorder %s18, 1
      %p83 = por %p81, %p82
      %p85 = scmp.ne.s32.totalorder %s70, %s84
      %p86 = scmp.eq.s32.totalorder %s18, 0
      %p87 = por %p85, %p86
      %s88 = ssub.s32 %s12, %s19
      %p89 = scmp.eq.s32.totalorder %s88, 0
      %s91 = sadd.s32 %s90, 1
      %s92 = scalar_select %p89, %s90, %s91
      %p95 = pneg %p89
      %p96 = scmp.eq.s32.totalorder %s12, 1
      %p97 = por %p95, %p96
      %p98 = scmp.ne.s32.totalorder %s90, %s93
      %p99 = scmp.eq.s32.totalorder %s12, 0
      %p100 = por %p98, %p99
      %p101 = scmp.ne.s32.totalorder %s90, %s93
      %p102 = scmp.eq.s32.totalorder %s17, 1
      %p103 = por %p101, %p102
      %p104 = scmp.ne.s32.totalorder %s93, %s94
      %p105 = scmp.eq.s32.totalorder %s17, 0
      %p106 = por %p104, %p105
      %p107 = scmp.ne.s32.totalorder %s93, %s94
      %p108 = scmp.eq.s32.totalorder %s18, 1
      %p109 = por %p107, %p108
      %p111 = scmp.ne.s32.totalorder %s94, %s110
      %p112 = scmp.eq.s32.totalorder %s18, 0
      %p113 = por %p111, %p112
      %p114 = scmp.le.s32.totalorder 1, %s12
      %p115 = scmp.lt.s32.totalorder %s12, 3
      %p116 = pnand %p114, %p115
      %p117 = pneg %p116
      // Predicated region
      $region9: #{tpu_custom_call.1} parent=5 // pred_check
        _
      $region10: #{tpu_custom_call.1} parent=5 // pred_check_branch
        %119 = sbr.rel (%p116) target = $region12
      $region11: #{tpu_custom_call.1} parent=5 // pred_region
        %s120 = ssub.s32 %s12, 1
        // Predicated region
        $region13: #{tpu_custom_call.1} parent=11 // pred_check
          %p121 = pneg %p59
        $region14: #{tpu_custom_call.1} parent=11 // pred_check_branch
          %123 = sbr.rel (%p121) target = $region16
        $region15: #{tpu_custom_call.1} parent=11 // pred_region
          _
        $region16: #{tpu_custom_call.1} parent=11 // pred_fallthru
          _
        // Predicated region
        $region17: #{tpu_custom_call.1} parent=11 // pred_check
          %p124 = pneg %p80
        $region18: #{tpu_custom_call.1} parent=11 // pred_check_branch
          %126 = sbr.rel (%p124) target = $region20
        $region19: #{tpu_custom_call.1} parent=11 // pred_region
          _
        $region20: #{tpu_custom_call.1} parent=11 // pred_fallthru
          _
      $region12: #{tpu_custom_call.1} parent=5 // pred_fallthru
        _
      %p127 = scmp.lt.s32.totalorder %s12, 2
      // Predicated region
      $region21: #{tpu_custom_call.1} parent=5 // pred_check
        %p128 = pneg %p127
      $region22: #{tpu_custom_call.1} parent=5 // pred_check_branch
        %130 = sbr.rel (%p128) target = $region24
      $region23: #{tpu_custom_call.1} parent=5 // pred_region
        // Predicated region
        $region25: #{tpu_custom_call.1} parent=23 // pred_check
          %p131 = pneg %p32
        $region26: #{tpu_custom_call.1} parent=23 // pred_check_branch
          %133 = sbr.rel (%p131) target = $region28
        $region27: #{tpu_custom_call.1} parent=23 // pred_region
          %p134 = scmp.lt.s32.totalorder %s12, 1
          %s135 = scalar_select %p134, %s12, 1
          %s136 = smul.addr %s135, 54
          %s137 = smul.addr %s136, 4
          %s138 = scalar_lea.vmem %s0, %s137
        $region28: #{tpu_custom_call.1} parent=23 // pred_fallthru
          _
      $region24: #{tpu_custom_call.1} parent=5 // pred_fallthru
        _
      %p139 = scmp.le.s32.totalorder 1, %s12
      %p140 = scmp.lt.s32.totalorder %s12, 3
      %p141 = pnand %p139, %p140
      %p142 = pneg %p141
      // Predicated region
      $region29: #{tpu_custom_call.1} parent=5 // pred_check
        _
      $region30: #{tpu_custom_call.1} parent=5 // pred_check_branch
        %144 = sbr.rel (%p141) target = $region32
      $region31: #{tpu_custom_call.1} parent=5 // pred_region
        %s145 = ssub.s32 %s12, 1
        %p146 = scmp.lt.s32.totalorder %s17, 1
        %s147 = scalar_select %p146, %s17, 1
        %s148 = smul.addr %s147, 54
        %s149 = smul.addr %s148, 4
        %s150 = scalar_lea.vmem %s0, %s149
        %p151 = pneg %p38
        %p152 = pneg %p35
        %p153 = pneg %p59
        %p154 = pneg %p56
        %p155 = pneg %p80
        %p156 = pneg %p77
        %p157 = pneg %p106
        %p158 = pneg %p103
        %s159 = sand.u32 %s93, 1
        %s160 = scalar_lea.sflag [#allocation3], %s159
        %s161 = sand.u32 %s93, 1
        %s162 = scalar_lea.vmem [#allocation2], %s161
        %p163 = scmp.lt.s32.totalorder %s17, 1
        %s164 = scalar_select %p163, %s17, 1
        %s165 = smul.addr %s164, 54
        %s166 = smul.addr %s165, 4
        %s167 = scalar_lea.vmem %s0, %s166
        %v169 = vld [vmem:[%s1] sm:$0xf]
        %v170 = vld [vmem:[%s1 + $0x4] sm:$0xf]
        %v171 = vld [vmem:[%s1 + $0x8] sm:$0xf]
        %v172 = vld [vmem:[%s1 + $0xc] sm:$0xf]
        %v173 = vld [vmem:[%s1 + $0x10] sm:$0x3]
        %v174 = vld [vmem:[%s2] sm:$0x1]
        %s175 = smul.u32 0, 3
        %s176 = smul.addr %s175, 4
        %s177 = scalar_lea.vmem %s167, %s176
        %v178 = vld [vmem:[%s177] sm:$0xf]
        %v179 = vld [vmem:[%s177 + $0x4] sm:$0xf]
        %v180 = vld [vmem:[%s177 + $0xc] sm:$0xf]
        %v181 = vld [vmem:[%s177 + $0x10] sm:$0xf]
        %v182 = vld [vmem:[%s177 + $0x18] sm:$0xf]
        %v183 = vld [vmem:[%s177 + $0x1c] sm:$0xf]
        %v184 = vld [vmem:[%s177 + $0x24] sm:$0xf]
        %v185 = vld [vmem:[%s177 + $0x28] sm:$0xf]
        %v186 = vld [vmem:[%s177 + $0x30] sm:$0xf]
        %v187 = vld [vmem:[%s177 + $0x34] sm:$0xf]
        %v188 = vld [vmem:[%s177 + $0x3c] sm:$0xf]
        %v189 = vld [vmem:[%s177 + $0x40] sm:$0xf]
        %v190 = vld [vmem:[%s177 + $0x48] sm:$0xf]
        %v191 = vld [vmem:[%s177 + $0x4c] sm:$0xf]
        %v192 = vld [vmem:[%s177 + $0x54] sm:$0xf]
        %v193 = vld [vmem:[%s177 + $0x58] sm:$0xf]
        %v196 = vunpack.c.l.b16 %v178
        %v197 = vunpack.c.l.b16 %v179
        %v198 = vpack.c.b16 %v197, %v196
        %v201 = vunpack.c.l.b16 %v180
        %v202 = vunpack.c.l.b16 %v181
        %v203 = vpack.c.b16 %v202, %v201
        %v206 = vunpack.c.l.b16 %v182
        %v207 = vunpack.c.l.b16 %v183
        %v208 = vpack.c.b16 %v207, %v206
        %v211 = vunpack.c.l.b16 %v184
        %v212 = vunpack.c.l.b16 %v185
        %v213 = vpack.c.b16 %v212, %v211
        %v216 = vunpack.c.l.b16 %v186
        %v217 = vunpack.c.l.b16 %v187
        %v218 = vpack.c.b16 %v217, %v216
        %v221 = vunpack.c.l.b16 %v188
        %v222 = vunpack.c.l.b16 %v189
        %v223 = vpack.c.b16 %v222, %v221
        %v226 = vunpack.c.l.b16 %v190
        %v227 = vunpack.c.l.b16 %v191
        %v228 = vpack.c.b16 %v227, %v226
        %v231 = vunpack.c.l.b16 %v192
        %v232 = vunpack.c.l.b16 %v193
        %v233 = vpack.c.b16 %v232, %v231
        %v234 = vld [vmem:[%s177 + $0x8] sm:$0x1]
        %v235 = vld [vmem:[%s177 + $0x14] sm:$0x1]
        %v236 = vld [vmem:[%s177 + $0x20] sm:$0x1]
        %v237 = vld [vmem:[%s177 + $0x2c] sm:$0x1]
        %v238 = vld [vmem:[%s177 + $0x38] sm:$0x1]
        %v239 = vld [vmem:[%s177 + $0x44] sm:$0x1]
        %v240 = vld [vmem:[%s177 + $0x50] sm:$0x1]
        %v241 = vld [vmem:[%s177 + $0x5c] sm:$0x1]
        %v243 = vunpack.c.l.b16 %v234
        %v244 = vpack.c.b16 %v243, %v243
        %vm245 = vsmask.f32 7424
        %v247 = vshrl.u32 %v198, 16
        %v249 = vshll.u32 %v198, 16
        %v251 = vrot.slane %v249, 1
        %v252 = vor.u32 %v247, %v251
        %v254 = vshll.u32 %v244, 16
        %v256 = vrot.slane %v254, 1
        %v257 = vsel %vm245, %v252, %v256
        %v259 = vunpack.c.l.b16 %v235
        %v260 = vpack.c.b16 %v259, %v259
        %v262 = vshrl.u32 %v203, 16
        %v264 = vshll.u32 %v203, 16
        %v266 = vrot.slane %v264, 1
        %v267 = vor.u32 %v262, %v266
        %v269 = vshll.u32 %v260, 16
        %v271 = vrot.slane %v269, 1
        %v272 = vsel %vm245, %v267, %v271
        %v274 = vunpack.c.l.b16 %v236
        %v275 = vpack.c.b16 %v274, %v274
        %v277 = vshrl.u32 %v208, 16
        %v279 = vshll.u32 %v208, 16
        %v281 = vrot.slane %v279, 1
        %v282 = vor.u32 %v277, %v281
        %v284 = vshll.u32 %v275, 16
        %v286 = vrot.slane %v284, 1
        %v287 = vsel %vm245, %v282, %v286
        %v289 = vunpack.c.l.b16 %v237
        %v290 = vpack.c.b16 %v289, %v289
        %v292 = vshrl.u32 %v213, 16
        %v294 = vshll.u32 %v213, 16
        %v296 = vrot.slane %v294, 1
        %v297 = vor.u32 %v292, %v296
        %v299 = vshll.u32 %v290, 16
        %v301 = vrot.slane %v299, 1
        %v302 = vsel %vm245, %v297, %v301
        %v304 = vunpack.c.l.b16 %v238
        %v305 = vpack.c.b16 %v304, %v304
        %v307 = vshrl.u32 %v218, 16
        %v309 = vshll.u32 %v218, 16
        %v311 = vrot.slane %v309, 1
        %v312 = vor.u32 %v307, %v311
        %v314 = vshll.u32 %v305, 16
        %v316 = vrot.slane %v314, 1
        %v317 = vsel %vm245, %v312, %v316
        %v319 = vunpack.c.l.b16 %v239
        %v320 = vpack.c.b16 %v319, %v319
        %v322 = vshrl.u32 %v223, 16
        %v324 = vshll.u32 %v223, 16
        %v326 = vrot.slane %v324, 1
        %v327 = vor.u32 %v322, %v326
        %v329 = vshll.u32 %v320, 16
        %v331 = vrot.slane %v329, 1
        %v332 = vsel %vm245, %v327, %v331
        %v334 = vunpack.c.l.b16 %v240
        %v335 = vpack.c.b16 %v334, %v334
        %v337 = vshrl.u32 %v228, 16
        %v339 = vshll.u32 %v228, 16
        %v341 = vrot.slane %v339, 1
        %v342 = vor.u32 %v337, %v341
        %v344 = vshll.u32 %v335, 16
        %v346 = vrot.slane %v344, 1
        %v347 = vsel %vm245, %v342, %v346
        %v349 = vunpack.c.l.b16 %v241
        %v350 = vpack.c.b16 %v349, %v349
        %v352 = vshrl.u32 %v233, 16
        %v354 = vshll.u32 %v233, 16
        %v356 = vrot.slane %v354, 1
        %v357 = vor.u32 %v352, %v356
        %v359 = vshll.u32 %v350, 16
        %v361 = vrot.slane %v359, 1
        %v362 = vsel %vm245, %v357, %v361
        %v363 = vld [vmem:[%s177] sm:$0xe]
        %v364 = vld [vmem:[%s177 + $0xc] sm:$0xe]
        %v365 = vld [vmem:[%s177 + $0x18] sm:$0xe]
        %v366 = vld [vmem:[%s177 + $0x24] sm:$0xe]
        %v367 = vld [vmem:[%s177 + $0x30] sm:$0xe]
        %v368 = vld [vmem:[%s177 + $0x3c] sm:$0xe]
        %v369 = vld [vmem:[%s177 + $0x48] sm:$0xe]
        %v370 = vld [vmem:[%s177 + $0x54] sm:$0xe]
        %v372 = vunpack.c.l.b16 %v363
        %v373 = vpack.c.b16 %v197, %v372
        %vm374 = vcmask 1046528
        %v375 = vrot.slane %v373, 1
        %v376 = vrot.slane %v244, 1
        %v377 = vsel %vm374, %v375, %v376
        %v379 = vunpack.c.l.b16 %v364
        %v380 = vpack.c.b16 %v202, %v379
        %v381 = vrot.slane %v380, 1
        %v382 = vrot.slane %v260, 1
        %v383 = vsel %vm374, %v381, %v382
        %v385 = vunpack.c.l.b16 %v365
        %v386 = vpack.c.b16 %v207, %v385
        %v387 = vrot.slane %v386, 1
        %v388 = vrot.slane %v275, 1
        %v389 = vsel %vm374, %v387, %v388
        %v391 = vunpack.c.l.b16 %v366
        %v392 = vpack.c.b16 %v212, %v391
        %v393 = vrot.slane %v392, 1
        %v394 = vrot.slane %v290, 1
        %v395 = vsel %vm374, %v393, %v394
        %v397 = vunpack.c.l.b16 %v367
        %v398 = vpack.c.b16 %v217, %v397
        %v399 = vrot.slane %v398, 1
        %v400 = vrot.slane %v305, 1
        %v401 = vsel %vm374, %v399, %v400
        %v403 = vunpack.c.l.b16 %v368
        %v404 = vpack.c.b16 %v222, %v403
        %v405 = vrot.slane %v404, 1
        %v406 = vrot.slane %v320, 1
        %v407 = vsel %vm374, %v405, %v406
        %v409 = vunpack.c.l.b16 %v369
        %v410 = vpack.c.b16 %v227, %v409
        %v411 = vrot.slane %v410, 1
        %v412 = vrot.slane %v335, 1
        %v413 = vsel %vm374, %v411, %v412
        %v415 = vunpack.c.l.b16 %v370
        %v416 = vpack.c.b16 %v232, %v415
        %v417 = vrot.slane %v416, 1
        %v418 = vrot.slane %v350, 1
        %v419 = vsel %vm374, %v417, %v418
        %s420 = sadd.s32 0, 1
        %s421 = smul.u32 %s420, 3
        %s422 = smul.addr %s421, 4
        %s423 = scalar_lea.vmem %s167, %s422
        %v424 = vld [vmem:[%s423] sm:$0xf]
        %v425 = vld [vmem:[%s423 + $0x4] sm:$0xf]
        %v426 = vld [vmem:[%s423 + $0xc] sm:$0xf]
        %v427 = vld [vmem:[%s423 + $0x10] sm:$0xf]
        %v428 = vld [vmem:[%s423 + $0x18] sm:$0xf]
        %v429 = vld [vmem:[%s423 + $0x1c] sm:$0xf]
        %v430 = vld [vmem:[%s423 + $0x24] sm:$0xf]
        %v431 = vld [vmem:[%s423 + $0x28] sm:$0xf]
        %v432 = vld [vmem:[%s423 + $0x30] sm:$0xf]
        %v433 = vld [vmem:[%s423 + $0x34] sm:$0xf]
        %v434 = vld [vmem:[%s423 + $0x3c] sm:$0xf]
        %v435 = vld [vmem:[%s423 + $0x40] sm:$0xf]
        %v436 = vld [vmem:[%s423 + $0x48] sm:$0xf]
        %v437 = vld [vmem:[%s423 + $0x4c] sm:$0xf]
        %v438 = vld [vmem:[%s423 + $0x54] sm:$0xf]
        %v439 = vld [vmem:[%s423 + $0x58] sm:$0xf]
        %v442 = vunpack.c.l.b16 %v424
        %v443 = vunpack.c.l.b16 %v425
        %v444 = vpack.c.b16 %v443, %v442
        %v447 = vunpack.c.l.b16 %v426
        %v448 = vunpack.c.l.b16 %v427
        %v449 = vpack.c.b16 %v448, %v447
        %v452 = vunpack.c.l.b16 %v428
        %v453 = vunpack.c.l.b16 %v429
        %v454 = vpack.c.b16 %v453, %v452
        %v457 = vunpack.c.l.b16 %v430
        %v458 = vunpack.c.l.b16 %v431
        %v459 = vpack.c.b16 %v458, %v457
        %v462 = vunpack.c.l.b16 %v432
        %v463 = vunpack.c.l.b16 %v433
        %v464 = vpack.c.b16 %v463, %v462
        %v467 = vunpack.c.l.b16 %v434
        %v468 = vunpack.c.l.b16 %v435
        %v469 = vpack.c.b16 %v468, %v467
        %v472 = vunpack.c.l.b16 %v436
        %v473 = vunpack.c.l.b16 %v437
        %v474 = vpack.c.b16 %v473, %v472
        %v477 = vunpack.c.l.b16 %v438
        %v478 = vunpack.c.l.b16 %v439
        %v479 = vpack.c.b16 %v478, %v477
        %v480 = vld [vmem:[%s423 + $0x8] sm:$0x1]
        %v481 = vld [vmem:[%s423 + $0x14] sm:$0x1]
        %v482 = vld [vmem:[%s423 + $0x20] sm:$0x1]
        %v483 = vld [vmem:[%s423 + $0x2c] sm:$0x1]
        %v484 = vld [vmem:[%s423 + $0x38] sm:$0x1]
        %v485 = vld [vmem:[%s423 + $0x44] sm:$0x1]
        %v486 = vld [vmem:[%s423 + $0x50] sm:$0x1]
        %v487 = vld [vmem:[%s423 + $0x5c] sm:$0x1]
        %v489 = vunpack.c.l.b16 %v480
        %v490 = vpack.c.b16 %v489, %v489
        %v492 = vshrl.u32 %v444, 16
        %v494 = vshll.u32 %v444, 16
        %v496 = vrot.slane %v494, 1
        %v497 = vor.u32 %v492, %v496
        %v499 = vshll.u32 %v490, 16
        %v501 = vrot.slane %v499, 1
        %v502 = vsel %vm245, %v497, %v501
        %v504 = vunpack.c.l.b16 %v481
        %v505 = vpack.c.b16 %v504, %v504
        %v507 = vshrl.u32 %v449, 16
        %v509 = vshll.u32 %v449, 16
        %v511 = vrot.slane %v509, 1
        %v512 = vor.u32 %v507, %v511
        %v514 = vshll.u32 %v505, 16
        %v516 = vrot.slane %v514, 1
        %v517 = vsel %vm245, %v512, %v516
        %v519 = vunpack.c.l.b16 %v482
        %v520 = vpack.c.b16 %v519, %v519
        %v522 = vshrl.u32 %v454, 16
        %v524 = vshll.u32 %v454, 16
        %v526 = vrot.slane %v524, 1
        %v527 = vor.u32 %v522, %v526
        %v529 = vshll.u32 %v520, 16
        %v531 = vrot.slane %v529, 1
        %v532 = vsel %vm245, %v527, %v531
        %v534 = vunpack.c.l.b16 %v483
        %v535 = vpack.c.b16 %v534, %v534
        %v537 = vshrl.u32 %v459, 16
        %v539 = vshll.u32 %v459, 16
        %v541 = vrot.slane %v539, 1
        %v542 = vor.u32 %v537, %v541
        %v544 = vshll.u32 %v535, 16
        %v546 = vrot.slane %v544, 1
        %v547 = vsel %vm245, %v542, %v546
        %v549 = vunpack.c.l.b16 %v484
        %v550 = vpack.c.b16 %v549, %v549
        %v552 = vshrl.u32 %v464, 16
        %v554 = vshll.u32 %v464, 16
        %v556 = vrot.slane %v554, 1
        %v557 = vor.u32 %v552, %v556
        %v559 = vshll.u32 %v550, 16
        %v561 = vrot.slane %v559, 1
        %v562 = vsel %vm245, %v557, %v561
        %v564 = vunpack.c.l.b16 %v485
        %v565 = vpack.c.b16 %v564, %v564
        %v567 = vshrl.u32 %v469, 16
        %v569 = vshll.u32 %v469, 16
        %v571 = vrot.slane %v569, 1
        %v572 = vor.u32 %v567, %v571
        %v574 = vshll.u32 %v565, 16
        %v576 = vrot.slane %v574, 1
        %v577 = vsel %vm245, %v572, %v576
        %v579 = vunpack.c.l.b16 %v486
        %v580 = vpack.c.b16 %v579, %v579
        %v582 = vshrl.u32 %v474, 16
        %v584 = vshll.u32 %v474, 16
        %v586 = vrot.slane %v584, 1
        %v587 = vor.u32 %v582, %v586
        %v589 = vshll.u32 %v580, 16
        %v591 = vrot.slane %v589, 1
        %v592 = vsel %vm245, %v587, %v591
        %v594 = vunpack.c.l.b16 %v487
        %v595 = vpack.c.b16 %v594, %v594
        %v597 = vshrl.u32 %v479, 16
        %v599 = vshll.u32 %v479, 16
        %v601 = vrot.slane %v599, 1
        %v602 = vor.u32 %v597, %v601
        %v604 = vshll.u32 %v595, 16
        %v606 = vrot.slane %v604, 1
        %v607 = vsel %vm245, %v602, %v606
        %v608 = vld [vmem:[%s423] sm:$0xe]
        %v609 = vld [vmem:[%s423 + $0xc] sm:$0xe]
        %v610 = vld [vmem:[%s423 + $0x18] sm:$0xe]
        %v611 = vld [vmem:[%s423 + $0x24] sm:$0xe]
        %v612 = vld [vmem:[%s423 + $0x30] sm:$0xe]
        %v613 = vld [vmem:[%s423 + $0x3c] sm:$0xe]
        %v614 = vld [vmem:[%s423 + $0x48] sm:$0xe]
        %v615 = vld [vmem:[%s423 + $0x54] sm:$0xe]
        %v617 = vunpack.c.l.b16 %v608
        %v618 = vpack.c.b16 %v443, %v617
        %v619 = vrot.slane %v618, 1
        %v620 = vrot.slane %v490, 1
        %v621 = vsel %vm374, %v619, %v620
        %v623 = vunpack.c.l.b16 %v609
        %v624 = vpack.c.b16 %v448, %v623
        %v625 = vrot.slane %v624, 1
        %v626 = vrot.slane %v505, 1
        %v627 = vsel %vm374, %v625, %v626
        %v629 = vunpack.c.l.b16 %v610
        %v630 = vpack.c.b16 %v453, %v629
        %v631 = vrot.slane %v630, 1
        %v632 = vrot.slane %v520, 1
        %v633 = vsel %vm374, %v631, %v632
        %v635 = vunpack.c.l.b16 %v611
        %v636 = vpack.c.b16 %v458, %v635
        %v637 = vrot.slane %v636, 1
        %v638 = vrot.slane %v535, 1
        %v639 = vsel %vm374, %v637, %v638
        %v641 = vunpack.c.l.b16 %v612
        %v642 = vpack.c.b16 %v463, %v641
        %v643 = vrot.slane %v642, 1
        %v644 = vrot.slane %v550, 1
        %v645 = vsel %vm374, %v643, %v644
        %v647 = vunpack.c.l.b16 %v613
        %v648 = vpack.c.b16 %v468, %v647
        %v649 = vrot.slane %v648, 1
        %v650 = vrot.slane %v565, 1
        %v651 = vsel %vm374, %v649, %v650
        %v653 = vunpack.c.l.b16 %v614
        %v654 = vpack.c.b16 %v473, %v653
        %v655 = vrot.slane %v654, 1
        %v656 = vrot.slane %v580, 1
        %v657 = vsel %vm374, %v655, %v656
        %v659 = vunpack.c.l.b16 %v615
        %v660 = vpack.c.b16 %v478, %v659
        %v661 = vrot.slane %v660, 1
        %v662 = vrot.slane %v595, 1
        %v663 = vsel %vm374, %v661, %v662
        %s664 = sadd.s32 0, 2
        %s665 = smul.u32 %s664, 3
        %s666 = smul.addr %s665, 4
        %s667 = scalar_lea.vmem %s167, %s666
        %v668 = vld [vmem:[%s667] sm:$0xf]
        %v669 = vld [vmem:[%s667 + $0x4] sm:$0xf]
        %v670 = vld [vmem:[%s667 + $0xc] sm:$0xf]
        %v671 = vld [vmem:[%s667 + $0x10] sm:$0xf]
        %v672 = vld [vmem:[%s667 + $0x18] sm:$0xf]
        %v673 = vld [vmem:[%s667 + $0x1c] sm:$0xf]
        %v674 = vld [vmem:[%s667 + $0x24] sm:$0xf]
        %v675 = vld [vmem:[%s667 + $0x28] sm:$0xf]
        %v676 = vld [vmem:[%s667 + $0x30] sm:$0xf]
        %v677 = vld [vmem:[%s667 + $0x34] sm:$0xf]
        %v678 = vld [vmem:[%s667 + $0x3c] sm:$0xf]
        %v679 = vld [vmem:[%s667 + $0x40] sm:$0xf]
        %v680 = vld [vmem:[%s667 + $0x48] sm:$0xf]
        %v681 = vld [vmem:[%s667 + $0x4c] sm:$0xf]
        %v682 = vld [vmem:[%s667 + $0x54] sm:$0xf]
        %v683 = vld [vmem:[%s667 + $0x58] sm:$0xf]
        %v686 = vunpack.c.l.b16 %v668
        %v687 = vunpack.c.l.b16 %v669
        %v688 = vpack.c.b16 %v687, %v686
        %v691 = vunpack.c.l.b16 %v670
        %v692 = vunpack.c.l.b16 %v671
        %v693 = vpack.c.b16 %v692, %v691
        %v696 = vunpack.c.l.b16 %v672
        %v697 = vunpack.c.l.b16 %v673
        %v698 = vpack.c.b16 %v697, %v696
        %v701 = vunpack.c.l.b16 %v674
        %v702 = vunpack.c.l.b16 %v675
        %v703 = vpack.c.b16 %v702, %v701
        %v706 = vunpack.c.l.b16 %v676
        %v707 = vunpack.c.l.b16 %v677
        %v708 = vpack.c.b16 %v707, %v706
        %v711 = vunpack.c.l.b16 %v678
        %v712 = vunpack.c.l.b16 %v679
        %v713 = vpack.c.b16 %v712, %v711
        %v716 = vunpack.c.l.b16 %v680
        %v717 = vunpack.c.l.b16 %v681
        %v718 = vpack.c.b16 %v717, %v716
        %v721 = vunpack.c.l.b16 %v682
        %v722 = vunpack.c.l.b16 %v683
        %v723 = vpack.c.b16 %v722, %v721
        %v724 = vld [vmem:[%s667 + $0x8] sm:$0x1]
        %v725 = vld [vmem:[%s667 + $0x14] sm:$0x1]
        %v726 = vld [vmem:[%s667 + $0x20] sm:$0x1]
        %v727 = vld [vmem:[%s667 + $0x2c] sm:$0x1]
        %v728 = vld [vmem:[%s667 + $0x38] sm:$0x1]
        %v729 = vld [vmem:[%s667 + $0x44] sm:$0x1]
        %v730 = vld [vmem:[%s667 + $0x50] sm:$0x1]
        %v731 = vld [vmem:[%s667 + $0x5c] sm:$0x1]
        %v733 = vunpack.c.l.b16 %v724
        %v734 = vpack.c.b16 %v733, %v733
        %v736 = vshrl.u32 %v688, 16
        %v738 = vshll.u32 %v688, 16
        %v740 = vrot.slane %v738, 1
        %v741 = vor.u32 %v736, %v740
        %v743 = vshll.u32 %v734, 16
        %v745 = vrot.slane %v743, 1
        %v746 = vsel %vm245, %v741, %v745
        %v748 = vunpack.c.l.b16 %v725
        %v749 = vpack.c.b16 %v748, %v748
        %v751 = vshrl.u32 %v693, 16
        %v753 = vshll.u32 %v693, 16
        %v755 = vrot.slane %v753, 1
        %v756 = vor.u32 %v751, %v755
        %v758 = vshll.u32 %v749, 16
        %v760 = vrot.slane %v758, 1
        %v761 = vsel %vm245, %v756, %v760
        %v763 = vunpack.c.l.b16 %v726
        %v764 = vpack.c.b16 %v763, %v763
        %v766 = vshrl.u32 %v698, 16
        %v768 = vshll.u32 %v698, 16
        %v770 = vrot.slane %v768, 1
        %v771 = vor.u32 %v766, %v770
        %v773 = vshll.u32 %v764, 16
        %v775 = vrot.slane %v773, 1
        %v776 = vsel %vm245, %v771, %v775
        %v778 = vunpack.c.l.b16 %v727
        %v779 = vpack.c.b16 %v778, %v778
        %v781 = vshrl.u32 %v703, 16
        %v783 = vshll.u32 %v703, 16
        %v785 = vrot.slane %v783, 1
        %v786 = vor.u32 %v781, %v785
        %v788 = vshll.u32 %v779, 16
        %v790 = vrot.slane %v788, 1
        %v791 = vsel %vm245, %v786, %v790
        %v793 = vunpack.c.l.b16 %v728
        %v794 = vpack.c.b16 %v793, %v793
        %v796 = vshrl.u32 %v708, 16
        %v798 = vshll.u32 %v708, 16
        %v800 = vrot.slane %v798, 1
        %v801 = vor.u32 %v796, %v800
        %v803 = vshll.u32 %v794, 16
        %v805 = vrot.slane %v803, 1
        %v806 = vsel %vm245, %v801, %v805
        %v808 = vunpack.c.l.b16 %v729
        %v809 = vpack.c.b16 %v808, %v808
        %v811 = vshrl.u32 %v713, 16
        %v813 = vshll.u32 %v713, 16
        %v815 = vrot.slane %v813, 1
        %v816 = vor.u32 %v811, %v815
        %v818 = vshll.u32 %v809, 16
        %v820 = vrot.slane %v818, 1
        %v821 = vsel %vm245, %v816, %v820
        %v823 = vunpack.c.l.b16 %v730
        %v824 = vpack.c.b16 %v823, %v823
        %v826 = vshrl.u32 %v718, 16
        %v828 = vshll.u32 %v718, 16
        %v830 = vrot.slane %v828, 1
        %v831 = vor.u32 %v826, %v830
        %v833 = vshll.u32 %v824, 16
        %v835 = vrot.slane %v833, 1
        %v836 = vsel %vm245, %v831, %v835
        %v838 = vunpack.c.l.b16 %v731
        %v839 = vpack.c.b16 %v838, %v838
        %v841 = vshrl.u32 %v723, 16
        %v843 = vshll.u32 %v723, 16
        %v845 = vrot.slane %v843, 1
        %v846 = vor.u32 %v841, %v845
        %v848 = vshll.u32 %v839, 16
        %v850 = vrot.slane %v848, 1
        %v851 = vsel %vm245, %v846, %v850
        %v852 = vld [vmem:[%s667] sm:$0xe]
        %v853 = vld [vmem:[%s667 + $0xc] sm:$0xe]
        %v854 = vld [vmem:[%s667 + $0x18] sm:$0xe]
        %v855 = vld [vmem:[%s667 + $0x24] sm:$0xe]
        %v856 = vld [vmem:[%s667 + $0x30] sm:$0xe]
        %v857 = vld [vmem:[%s667 + $0x3c] sm:$0xe]
        %v858 = vld [vmem:[%s667 + $0x48] sm:$0xe]
        %v859 = vld [vmem:[%s667 + $0x54] sm:$0xe]
        %v861 = vunpack.c.l.b16 %v852
        %v862 = vpack.c.b16 %v687, %v861
        %v863 = vrot.slane %v862, 1
        %v864 = vrot.slane %v734, 1
        %v865 = vsel %vm374, %v863, %v864
        %v867 = vunpack.c.l.b16 %v853
        %v868 = vpack.c.b16 %v692, %v867
        %v869 = vrot.slane %v868, 1
        %v870 = vrot.slane %v749, 1
        %v871 = vsel %vm374, %v869, %v870
        %v873 = vunpack.c.l.b16 %v854
        %v874 = vpack.c.b16 %v697, %v873
        %v875 = vrot.slane %v874, 1
        %v876 = vrot.slane %v764, 1
        %v877 = vsel %vm374, %v875, %v876
        %v879 = vunpack.c.l.b16 %v855
        %v880 = vpack.c.b16 %v702, %v879
        %v881 = vrot.slane %v880, 1
        %v882 = vrot.slane %v779, 1
        %v883 = vsel %vm374, %v881, %v882
        %v885 = vunpack.c.l.b16 %v856
        %v886 = vpack.c.b16 %v707, %v885
        %v887 = vrot.slane %v886, 1
        %v888 = vrot.slane %v794, 1
        %v889 = vsel %vm374, %v887, %v888
        %v891 = vunpack.c.l.b16 %v857
        %v892 = vpack.c.b16 %v712, %v891
        %v893 = vrot.slane %v892, 1
        %v894 = vrot.slane %v809, 1
        %v895 = vsel %vm374, %v893, %v894
        %v897 = vunpack.c.l.b16 %v858
        %v898 = vpack.c.b16 %v717, %v897
        %v899 = vrot.slane %v898, 1
        %v900 = vrot.slane %v824, 1
        %v901 = vsel %vm374, %v899, %v900
        %v903 = vunpack.c.l.b16 %v859
        %v904 = vpack.c.b16 %v722, %v903
        %v905 = vrot.slane %v904, 1
        %v906 = vrot.slane %v839, 1
        %v907 = vsel %vm374, %v905, %v906
        %908 = vrot.lane.b32.xlu0 %v257, 4
        %v909 = vpop.permute.xlu0 %908
        %910 = vrot.lane.b32.xlu0 %v272, 4
        %v911 = vpop.permute.xlu0 %910
        %912 = vrot.lane.b32.xlu0 %v287, 4
        %v913 = vpop.permute.xlu0 %912
        %914 = vrot.lane.b32.xlu0 %v302, 4
        %v915 = vpop.permute.xlu0 %914
        %916 = vrot.lane.b32.xlu0 %v317, 4
        %v917 = vpop.permute.xlu0 %916
        %918 = vrot.lane.b32.xlu0 %v332, 4
        %v919 = vpop.permute.xlu0 %918
        %920 = vrot.lane.b32.xlu0 %v347, 4
        %v921 = vpop.permute.xlu0 %920
        %922 = vrot.lane.b32.xlu0 %v362, 4
        %v923 = vpop.permute.xlu0 %922
        %924 = vrot.lane.b32.xlu0 %v377, 8
        %v925 = vpop.permute.xlu0 %924
        %926 = vrot.lane.b32.xlu0 %v383, 8
        %v927 = vpop.permute.xlu0 %926
        %928 = vrot.lane.b32.xlu0 %v389, 8
        %v929 = vpop.permute.xlu0 %928
        %930 = vrot.lane.b32.xlu0 %v395, 8
        %v931 = vpop.permute.xlu0 %930
        %932 = vrot.lane.b32.xlu0 %v401, 8
        %v933 = vpop.permute.xlu0 %932
        %934 = vrot.lane.b32.xlu0 %v407, 8
        %v935 = vpop.permute.xlu0 %934
        %936 = vrot.lane.b32.xlu0 %v413, 8
        %v937 = vpop.permute.xlu0 %936
        %938 = vrot.lane.b32.xlu0 %v419, 8
        %v939 = vpop.permute.xlu0 %938
        %940 = vrot.lane.b32.xlu0 %v444, 12
        %v941 = vpop.permute.xlu0 %940
        %942 = vrot.lane.b32.xlu0 %v449, 12
        %v943 = vpop.permute.xlu0 %942
        %944 = vrot.lane.b32.xlu0 %v454, 12
        %v945 = vpop.permute.xlu0 %944
        %946 = vrot.lane.b32.xlu0 %v459, 12
        %v947 = vpop.permute.xlu0 %946
        %948 = vrot.lane.b32.xlu0 %v464, 12
        %v949 = vpop.permute.xlu0 %948
        %950 = vrot.lane.b32.xlu0 %v469, 12
        %v951 = vpop.permute.xlu0 %950
        %952 = vrot.lane.b32.xlu0 %v474, 12
        %v953 = vpop.permute.xlu0 %952
        %954 = vrot.lane.b32.xlu0 %v479, 12
        %v955 = vpop.permute.xlu0 %954
        %956 = vrot.lane.b32.xlu0 %v502, 16
        %v957 = vpop.permute.xlu0 %956
        %958 = vrot.lane.b32.xlu0 %v517, 16
        %v959 = vpop.permute.xlu0 %958
        %960 = vrot.lane.b32.xlu0 %v532, 16
        %v961 = vpop.permute.xlu0 %960
        %962 = vrot.lane.b32.xlu0 %v547, 16
        %v963 = vpop.permute.xlu0 %962
        %964 = vrot.lane.b32.xlu0 %v562, 16
        %v965 = vpop.permute.xlu0 %964
        %966 = vrot.lane.b32.xlu0 %v577, 16
        %v967 = vpop.permute.xlu0 %966
        %968 = vrot.lane.b32.xlu0 %v592, 16
        %v969 = vpop.permute.xlu0 %968
        %970 = vrot.lane.b32.xlu0 %v607, 16
        %v971 = vpop.permute.xlu0 %970
        %972 = vrot.lane.b32.xlu0 %v621, 20
        %v973 = vpop.permute.xlu0 %972
        %974 = vrot.lane.b32.xlu0 %v627, 20
        %v975 = vpop.permute.xlu0 %974
        %976 = vrot.lane.b32.xlu0 %v633, 20
        %v977 = vpop.permute.xlu0 %976
        %978 = vrot.lane.b32.xlu0 %v639, 20
        %v979 = vpop.permute.xlu0 %978
        %980 = vrot.lane.b32.xlu0 %v645, 20
        %v981 = vpop.permute.xlu0 %980
        %982 = vrot.lane.b32.xlu0 %v651, 20
        %v983 = vpop.permute.xlu0 %982
        %984 = vrot.lane.b32.xlu0 %v657, 20
        %v985 = vpop.permute.xlu0 %984
        %986 = vrot.lane.b32.xlu0 %v663, 20
        %v987 = vpop.permute.xlu0 %986
        %988 = vrot.lane.b32.xlu0 %v688, 24
        %v989 = vpop.permute.xlu0 %988
        %990 = vrot.lane.b32.xlu0 %v693, 24
        %v991 = vpop.permute.xlu0 %990
        %992 = vrot.lane.b32.xlu0 %v698, 24
        %v993 = vpop.permute.xlu0 %992
        %994 = vrot.lane.b32.xlu0 %v703, 24
        %v995 = vpop.permute.xlu0 %994
        %996 = vrot.lane.b32.xlu0 %v708, 24
        %v997 = vpop.permute.xlu0 %996
        %998 = vrot.lane.b32.xlu0 %v713, 24
        %v999 = vpop.permute.xlu0 %998
        %1000 = vrot.lane.b32.xlu0 %v718, 24
        %v1001 = vpop.permute.xlu0 %1000
        %1002 = vrot.lane.b32.xlu0 %v723, 24
        %v1003 = vpop.permute.xlu0 %1002
        %1004 = vrot.lane.b32.xlu0 %v746, 28
        %v1005 = vpop.permute.xlu0 %1004
        %1006 = vrot.lane.b32.xlu0 %v761, 28
        %v1007 = vpop.permute.xlu0 %1006
        %1008 = vrot.lane.b32.xlu0 %v776, 28
        %v1009 = vpop.permute.xlu0 %1008
        %1010 = vrot.lane.b32.xlu0 %v791, 28
        %v1011 = vpop.permute.xlu0 %1010
        %1012 = vrot.lane.b32.xlu0 %v806, 28
        %v1013 = vpop.permute.xlu0 %1012
        %1014 = vrot.lane.b32.xlu0 %v821, 28
        %v1015 = vpop.permute.xlu0 %1014
        %1016 = vrot.lane.b32.xlu0 %v836, 28
        %v1017 = vpop.permute.xlu0 %1016
        %1018 = vrot.lane.b32.xlu0 %v851, 28
        %v1019 = vpop.permute.xlu0 %1018
        %1020 = vrot.lane.b32.xlu0 %v865, 32
        %v1021 = vpop.permute.xlu0 %1020
        %1022 = vrot.lane.b32.xlu0 %v871, 32
        %v1023 = vpop.permute.xlu0 %1022
        %1024 = vrot.lane.b32.xlu0 %v877, 32
        %v1025 = vpop.permute.xlu0 %1024
        %1026 = vrot.lane.b32.xlu0 %v883, 32
        %v1027 = vpop.permute.xlu0 %1026
        %1028 = vrot.lane.b32.xlu0 %v889, 32
        %v1029 = vpop.permute.xlu0 %1028
        %1030 = vrot.lane.b32.xlu0 %v895, 32
        %v1031 = vpop.permute.xlu0 %1030
        %1032 = vrot.lane.b32.xlu0 %v901, 32
        %v1033 = vpop.permute.xlu0 %1032
        %1034 = vrot.lane.b32.xlu0 %v907, 32
        %v1035 = vpop.permute.xlu0 %1034
        %vm1036 = vcmask 31744
        %v1038 = vsel %vm1036, %v198, %v909
        %v1040 = vsel %vm1036, %v203, %v911
        %v1042 = vsel %vm1036, %v208, %v913
        %v1044 = vsel %vm1036, %v213, %v915
        %v1046 = vsel %vm1036, %v218, %v917
        %v1048 = vsel %vm1036, %v223, %v919
        %v1050 = vsel %vm1036, %v228, %v921
        %v1052 = vsel %vm1036, %v233, %v923
        %vm1053 = vcmask 64512
        %v1055 = vsel %vm1053, %v1038, %v925
        %v1057 = vsel %vm1053, %v1040, %v927
        %v1059 = vsel %vm1053, %v1042, %v929
        %v1061 = vsel %vm1053, %v1044, %v931
        %v1063 = vsel %vm1053, %v1046, %v933
        %v1065 = vsel %vm1053, %v1048, %v935
        %v1067 = vsel %vm1053, %v1050, %v937
        %v1069 = vsel %vm1053, %v1052, %v939
        %vm1070 = vcmask 97280
        %v1072 = vsel %vm1070, %v1055, %v941
        %v1074 = vsel %vm1070, %v1057, %v943
        %v1076 = vsel %vm1070, %v1059, %v945
        %v1078 = vsel %vm1070, %v1061, %v947
        %v1080 = vsel %vm1070, %v1063, %v949
        %v1082 = vsel %vm1070, %v1065, %v951
        %v1084 = vsel %vm1070, %v1067, %v953
        %v1086 = vsel %vm1070, %v1069, %v955
        %vm1087 = vcmask 130048
        %v1089 = vsel %vm1087, %v1072, %v957
        %v1091 = vsel %vm1087, %v1074, %v959
        %v1093 = vsel %vm1087, %v1076, %v961
        %v1095 = vsel %vm1087, %v1078, %v963
        %v1097 = vsel %vm1087, %v1080, %v965
        %v1099 = vsel %vm1087, %v1082, %v967
        %v1101 = vsel %vm1087, %v1084, %v969
        %v1103 = vsel %vm1087, %v1086, %v971
        %vm1104 = vcmask 162816
        %v1106 = vsel %vm1104, %v1089, %v973
        %v1108 = vsel %vm1104, %v1091, %v975
        %v1110 = vsel %vm1104, %v1093, %v977
        %v1112 = vsel %vm1104, %v1095, %v979
        %v1114 = vsel %vm1104, %v1097, %v981
        %v1116 = vsel %vm1104, %v1099, %v983
        %v1118 = vsel %vm1104, %v1101, %v985
        %v1120 = vsel %vm1104, %v1103, %v987
        %vm1121 = vcmask 195584
        %v1123 = vsel %vm1121, %v1106, %v989
        %v1125 = vsel %vm1121, %v1108, %v991
        %v1127 = vsel %vm1121, %v1110, %v993
        %v1129 = vsel %vm1121, %v1112, %v995
        %v1131 = vsel %vm1121, %v1114, %v997
        %v1133 = vsel %vm1121, %v1116, %v999
        %v1135 = vsel %vm1121, %v1118, %v1001
        %v1137 = vsel %vm1121, %v1120, %v1003
        %vm1138 = vcmask 228352
        %v1140 = vsel %vm1138, %v1123, %v1005
        %v1142 = vsel %vm1138, %v1125, %v1007
        %v1144 = vsel %vm1138, %v1127, %v1009
        %v1146 = vsel %vm1138, %v1129, %v1011
        %v1148 = vsel %vm1138, %v1131, %v1013
        %v1150 = vsel %vm1138, %v1133, %v1015
        %v1152 = vsel %vm1138, %v1135, %v1017
        %v1154 = vsel %vm1138, %v1137, %v1019
        %vm1155 = vcmask 261120
        %v1157 = vsel %vm1155, %v1140, %v1021
        %v1159 = vsel %vm1155, %v1142, %v1023
        %v1161 = vsel %vm1155, %v1144, %v1025
        %v1163 = vsel %vm1155, %v1146, %v1027
        %v1165 = vsel %vm1155, %v1148, %v1029
        %v1167 = vsel %vm1155, %v1150, %v1031
        %v1169 = vsel %vm1155, %v1152, %v1033
        %v1171 = vsel %vm1155, %v1154, %v1035
        %v1173 = vlaneseq
        %v1174 = vshrl.u32 %v1173, 7
        %v1175 = vsub.s32 0, %v1174
        %v1176 = vrot.slane %v174, %v1175
        %v1183 = vunpack.c.l.b16 %v169
        %v1184 = vunpack.c.l.b16 %v170
        %v1185 = vunpack.c.l.b16 %v171
        %v1186 = vunpack.c.l.b16 %v172
        %v1187 = vunpack.c.l.b16 %v173
        %v1188 = vpack.c.b16 %v1184, %v1183
        %v1189 = vpack.c.b16 %v1186, %v1185
        %v1190 = vpack.c.b16 %v1187, %v1187
        %vm1193 = vcmask 293888
        %v1194 = vsel %vm1193, %v1157, 0
        %v1196 = vsel %vm1193, %v1159, 0
        %v1198 = vsel %vm1193, %v1161, 0
        %v1200 = vsel %vm1193, %v1163, 0
        %v1202 = vsel %vm1193, %v1165, 0
        %v1204 = vsel %vm1193, %v1167, 0
        %v1206 = vsel %vm1193, %v1169, 0
        %v1208 = vsel %vm1193, %v1171, 0
        %vm1210 = vcmask 1041408
        %v1212 = vsel %vm1210, %v1190, 0
        %1214 = vmatprep.subr.bf16.mxu0 0
        %1215 = vmatpush1.bf16.msra.mxu0 %v1188
        %1216 = vmatprep.subr.bf16.mxu0 0
        %1217 = vmatpush1.bf16.msra.mxu0 %v1189
        %1218 = vmatprep.subr.bf16.mxu0 0
        %1219 = vmatpush1.bf16.msra.mxu0 %v1212
        %1220 = vmatprep.subr.bf16.mxu0 0
        %1221 = vmatpush1.bf16.msra.mxu0 0
        %1222 = vmatprep.subr.bf16.mxu0 0
        %1223 = vmatpush1.bf16.msra.mxu0 0
        %1224 = vmatprep.subr.bf16.mxu0 0
        %1225 = vmatpush1.bf16.msra.mxu0 0
        %1226 = vmatprep.subr.bf16.mxu0 0
        %1227 = vmatpush1.bf16.msra.mxu0 0
        %1228 = vmatprep.subr.bf16.mxu0 0
        %1229 = vmatpush1.bf16.msra.mxu0 0
        %1230 = vmatprep.subr.bf16.mxu0 0
        %1231 = vmatpush1.bf16.msra.mxu0 0
        %1232 = vmatprep.subr.bf16.mxu0 0
        %1233 = vmatpush1.bf16.msra.mxu0 0
        %1234 = vmatprep.subr.bf16.mxu0 0
        %1235 = vmatpush1.bf16.msra.mxu0 0
        %1236 = vmatprep.subr.bf16.mxu0 0
        %1237 = vmatpush1.bf16.msra.mxu0 0
        %1238 = vmatprep.subr.bf16.mxu0 0
        %1239 = vmatpush1.bf16.msra.mxu0 0
        %1240 = vmatprep.subr.bf16.mxu0 0
        %1241 = vmatpush1.bf16.msra.mxu0 0
        %1242 = vmatprep.subr.bf16.mxu0 0
        %1243 = vmatpush1.bf16.msra.mxu0 0
        %1244 = vmatprep.subr.bf16.mxu0 0
        %1245 = vmatpush1.bf16.msra.mxu0 0
        %1246 = vmatprep.mubr.bf16.mxu0 0
        %1247 = vmatmul.mubr.bf16.gmra.mrb[0].mxu0 %v1194
        %v1248 = vpop.f32.mrb[0].mxu0
        %v1249 = vadd.f32 %v1176, %v1248
        %v1250 = vpop.f32.mrb[0].mxu0
        %v1251 = vpop.f32.mrb[0].mxu0
        %v1252 = vadd.f32 %v1176, %v1251
        %v1253 = vpop.f32.mrb[0].mxu0
        %1254 = vmatprep.mubr.bf16.mxu0 0
        %1255 = vmatmul.mubr.bf16.gmra.mrb[0].mxu0 %v1196
        %v1256 = vpop.f32.mrb[0].mxu0
        %v1257 = vadd.f32 %v1176, %v1256
        %v1258 = vpop.f32.mrb[0].mxu0
        %v1259 = vpop.f32.mrb[0].mxu0
        %v1260 = vadd.f32 %v1176, %v1259
        %v1261 = vpop.f32.mrb[0].mxu0
        %1262 = vmatprep.mubr.bf16.mxu0 0
        %1263 = vmatmul.mubr.bf16.gmra.mrb[0].mxu0 %v1198
        %v1264 = vpop.f32.mrb[0].mxu0
        %v1265 = vadd.f32 %v1176, %v1264
        %v1266 = vpop.f32.mrb[0].mxu0
        %v1267 = vpop.f32.mrb[0].mxu0
        %v1268 = vadd.f32 %v1176, %v1267
        %v1269 = vpop.f32.mrb[0].mxu0
        %1270 = vmatprep.mubr.bf16.mxu0 0
        %1271 = vmatmul.mubr.bf16.gmra.mrb[0].mxu0 %v1200
        %v1272 = vpop.f32.mrb[0].mxu0
        %v1273 = vadd.f32 %v1176, %v1272
        %v1274 = vpop.f32.mrb[0].mxu0
        %v1275 = vpop.f32.mrb[0].mxu0
        %v1276 = vadd.f32 %v1176, %v1275
        %v1277 = vpop.f32.mrb[0].mxu0
        %1278 = vmatprep.mubr.bf16.mxu0 0
        %1279 = vmatmul.mubr.bf16.gmra.mrb[0].mxu0 %v1202
        %v1280 = vpop.f32.mrb[0].mxu0
        %v1281 = vadd.f32 %v1176, %v1280
        %v1282 = vpop.f32.mrb[0].mxu0
        %v1283 = vpop.f32.mrb[0].mxu0
        %v1284 = vadd.f32 %v1176, %v1283
        %v1285 = vpop.f32.mrb[0].mxu0
        %1286 = vmatprep.mubr.bf16.mxu0 0
        %1287 = vmatmul.mubr.bf16.gmra.mrb[0].mxu0 %v1204
        %v1288 = vpop.f32.mrb[0].mxu0
        %v1289 = vadd.f32 %v1176, %v1288
        %v1290 = vpop.f32.mrb[0].mxu0
        %v1291 = vpop.f32.mrb[0].mxu0
        %v1292 = vadd.f32 %v1176, %v1291
        %v1293 = vpop.f32.mrb[0].mxu0
        %1294 = vmatprep.mubr.bf16.mxu0 0
        %1295 = vmatmul.mubr.bf16.gmra.mrb[0].mxu0 %v1206
        %v1296 = vpop.f32.mrb[0].mxu0
        %v1297 = vadd.f32 %v1176, %v1296
        %v1298 = vpop.f32.mrb[0].mxu0
        %v1299 = vpop.f32.mrb[0].mxu0
        %v1300 = vadd.f32 %v1176, %v1299
        %v1301 = vpop.f32.mrb[0].mxu0
        %1302 = vmatprep.mubr.bf16.mxu0 0
        %1303 = vmatmul.mubr.bf16.gmra.mrb[0].mxu0 %v1208
        %v1304 = vpop.f32.mrb[0].mxu0
        %v1305 = vadd.f32 %v1176, %v1304
        %v1306 = vpop.f32.mrb[0].mxu0
        %v1307 = vpop.f32.mrb[0].mxu0
        %v1308 = vadd.f32 %v1176, %v1307
        %v1309 = vpop.f32.mrb[0].mxu0
        %1310 = vdwg.mxu0
        %v1311 = vmax.f32 %v1249, 0.0
        %v1312 = vmax.f32 %v1252, 0.0
        %v1313 = vmax.f32 %v1257, 0.0
        %v1314 = vmax.f32 %v1260, 0.0
        %v1315 = vmax.f32 %v1265, 0.0
        %v1316 = vmax.f32 %v1268, 0.0
        %v1317 = vmax.f32 %v1273, 0.0
        %v1318 = vmax.f32 %v1276, 0.0
        %v1319 = vmax.f32 %v1281, 0.0
        %v1320 = vmax.f32 %v1284, 0.0
        %v1321 = vmax.f32 %v1289, 0.0
        %v1322 = vmax.f32 %v1292, 0.0
        %v1323 = vmax.f32 %v1297, 0.0
        %v1324 = vmax.f32 %v1300, 0.0
        %v1325 = vmax.f32 %v1305, 0.0
        %v1326 = vmax.f32 %v1308, 0.0
        %v1327 = vadd.f32 %v1311, 0.0
        %v1328 = vadd.f32 %v1312, 0.0
        %v1329 = vadd.f32 %v1313, 0.0
        %v1330 = vadd.f32 %v1314, 0.0
        %v1331 = vadd.f32 %v1315, 0.0
        %v1332 = vadd.f32 %v1316, 0.0
        %v1333 = vadd.f32 %v1317, 0.0
        %v1334 = vadd.f32 %v1318, 0.0
        %v1335 = vadd.f32 %v1319, 0.0
        %v1336 = vadd.f32 %v1320, 0.0
        %v1337 = vadd.f32 %v1321, 0.0
        %v1338 = vadd.f32 %v1322, 0.0
        %v1339 = vadd.f32 %v1323, 0.0
        %v1340 = vadd.f32 %v1324, 0.0
        %v1341 = vadd.f32 %v1325, 0.0
        %v1342 = vadd.f32 %v1326, 0.0
        %s1343 = smul.u32 8, 3
        %s1344 = smul.addr %s1343, 4
        %s1345 = scalar_lea.vmem %s167, %s1344
        %v1346 = vld [vmem:[%s1345] sm:$0xf]
        %v1347 = vld [vmem:[%s1345 + $0x4] sm:$0xf]
        %v1348 = vld [vmem:[%s1345 + $0xc] sm:$0xf]
        %v1349 = vld [vmem:[%s1345 + $0x10] sm:$0xf]
        %v1350 = vld [vmem:[%s1345 + $0x18] sm:$0xf]
        %v1351 = vld [vmem:[%s1345 + $0x1c] sm:$0xf]
        %v1352 = vld [vmem:[%s1345 + $0x24] sm:$0xf]
        %v1353 = vld [vmem:[%s1345 + $0x28] sm:$0xf]
        %v1354 = vld [vmem:[%s1345 + $0x30] sm:$0xf]
        %v1355 = vld [vmem:[%s1345 + $0x34] sm:$0xf]
        %v1356 = vld [vmem:[%s1345 + $0x3c] sm:$0xf]
        %v1357 = vld [vmem:[%s1345 + $0x40] sm:$0xf]
        %v1358 = vld [vmem:[%s1345 + $0x48] sm:$0xf]
        %v1359 = vld [vmem:[%s1345 + $0x4c] sm:$0xf]
        %v1360 = vld [vmem:[%s1345 + $0x54] sm:$0xf]
        %v1361 = vld [vmem:[%s1345 + $0x58] sm:$0xf]
        %v1364 = vunpack.c.l.b16 %v1346
        %v1365 = vunpack.c.l.b16 %v1347
        %v1366 = vpack.c.b16 %v1365, %v1364
        %v1369 = vunpack.c.l.b16 %v1348
        %v1370 = vunpack.c.l.b16 %v1349
        %v1371 = vpack.c.b16 %v1370, %v1369
        %v1374 = vunpack.c.l.b16 %v1350
        %v1375 = vunpack.c.l.b16 %v1351
        %v1376 = vpack.c.b16 %v1375, %v1374
        %v1379 = vunpack.c.l.b16 %v1352
        %v1380 = vunpack.c.l.b16 %v1353
        %v1381 = vpack.c.b16 %v1380, %v1379
        %v1384 = vunpack.c.l.b16 %v1354
        %v1385 = vunpack.c.l.b16 %v1355
        %v1386 = vpack.c.b16 %v1385, %v1384
        %v1389 = vunpack.c.l.b16 %v1356
        %v1390 = vunpack.c.l.b16 %v1357
        %v1391 = vpack.c.b16 %v1390, %v1389
        %v1394 = vunpack.c.l.b16 %v1358
        %v1395 = vunpack.c.l.b16 %v1359
        %v1396 = vpack.c.b16 %v1395, %v1394
        %v1399 = vunpack.c.l.b16 %v1360
        %v1400 = vunpack.c.l.b16 %v1361
        %v1401 = vpack.c.b16 %v1400, %v1399
        %v1402 = vld [vmem:[%s1345 + $0x8] sm:$0x1]
        %v1403 = vld [vmem:[%s1345 + $0x14] sm:$0x1]
        %v1404 = vld [vmem:[%s1345 + $0x20] sm:$0x1]
        %v1405 = vld [vmem:[%s1345 + $0x2c] sm:$0x1]
        %v1406 = vld [vmem:[%s1345 + $0x38] sm:$0x1]
        %v1407 = vld [vmem:[%s1345 + $0x44] sm:$0x1]
        %v1408 = vld [vmem:[%s1345 + $0x50] sm:$0x1]
        %v1409 = vld [vmem:[%s1345 + $0x5c] sm:$0x1]
        %v1411 = vunpack.c.l.b16 %v1402
        %v1412 = vpack.c.b16 %v1411, %v1411
        %v1414 = vshrl.u32 %v1366, 16
        %v1416 = vshll.u32 %v1366, 16
        %v1418 = vrot.slane %v1416, 1
        %v1419 = vor.u32 %v1414, %v1418
        %v1421 = vshll.u32 %v1412, 16
        %v1423 = vrot.slane %v1421, 1
        %v1424 = vsel %vm245, %v1419, %v1423
        %v1426 = vunpack.c.l.b16 %v1403
        %v1427 = vpack.c.b16 %v1426, %v1426
        %v1429 = vshrl.u32 %v1371, 16
        %v1431 = vshll.u32 %v1371, 16
        %v1433 = vrot.slane %v1431, 1
        %v1434 = vor.u32 %v1429, %v1433
        %v1436 = vshll.u32 %v1427, 16
        %v1438 = vrot.slane %v1436, 1
        %v1439 = vsel %vm245, %v1434, %v1438
        %v1441 = vunpack.c.l.b16 %v1404
        %v1442 = vpack.c.b16 %v1441, %v1441
        %v1444 = vshrl.u32 %v1376, 16
        %v1446 = vshll.u32 %v1376, 16
        %v1448 = vrot.slane %v1446, 1
        %v1449 = vor.u32 %v1444, %v1448
        %v1451 = vshll.u32 %v1442, 16
        %v1453 = vrot.slane %v1451, 1
        %v1454 = vsel %vm245, %v1449, %v1453
        %v1456 = vunpack.c.l.b16 %v1405
        %v1457 = vpack.c.b16 %v1456, %v1456
        %v1459 = vshrl.u32 %v1381, 16
        %v1461 = vshll.u32 %v1381, 16
        %v1463 = vrot.slane %v1461, 1
        %v1464 = vor.u32 %v1459, %v1463
        %v1466 = vshll.u32 %v1457, 16
        %v1468 = vrot.slane %v1466, 1
        %v1469 = vsel %vm245, %v1464, %v1468
        %v1471 = vunpack.c.l.b16 %v1406
        %v1472 = vpack.c.b16 %v1471, %v1471
        %v1474 = vshrl.u32 %v1386, 16
        %v1476 = vshll.u32 %v1386, 16
        %v1478 = vrot.slane %v1476, 1
        %v1479 = vor.u32 %v1474, %v1478
        %v1481 = vshll.u32 %v1472, 16
        %v1483 = vrot.slane %v1481, 1
        %v1484 = vsel %vm245, %v1479, %v1483
        %v1486 = vunpack.c.l.b16 %v1407
        %v1487 = vpack.c.b16 %v1486, %v1486
        %v1489 = vshrl.u32 %v1391, 16
        %v1491 = vshll.u32 %v1391, 16
        %v1493 = vrot.slane %v1491, 1
        %v1494 = vor.u32 %v1489, %v1493
        %v1496 = vshll.u32 %v1487, 16
        %v1498 = vrot.slane %v1496, 1
        %v1499 = vsel %vm245, %v1494, %v1498
        %v1501 = vunpack.c.l.b16 %v1408
        %v1502 = vpack.c.b16 %v1501, %v1501
        %v1504 = vshrl.u32 %v1396, 16
        %v1506 = vshll.u32 %v1396, 16
        %v1508 = vrot.slane %v1506, 1
        %v1509 = vor.u32 %v1504, %v1508
        %v1511 = vshll.u32 %v1502, 16
        %v1513 = vrot.slane %v1511, 1
        %v1514 = vsel %vm245, %v1509, %v1513
        %v1516 = vunpack.c.l.b16 %v1409
        %v1517 = vpack.c.b16 %v1516, %v1516
        %v1519 = vshrl.u32 %v1401, 16
        %v1521 = vshll.u32 %v1401, 16
        %v1523 = vrot.slane %v1521, 1
        %v1524 = vor.u32 %v1519, %v1523
        %v1526 = vshll.u32 %v1517, 16
        %v1528 = vrot.slane %v1526, 1
        %v1529 = vsel %vm245, %v1524, %v1528
        %v1530 = vld [vmem:[%s1345] sm:$0xe]
        %v1531 = vld [vmem:[%s1345 + $0xc] sm:$0xe]
        %v1532 = vld [vmem:[%s1345 + $0x18] sm:$0xe]
        %v1533 = vld [vmem:[%s1345 + $0x24] sm:$0xe]
        %v1534 = vld [vmem:[%s1345 + $0x30] sm:$0xe]
        %v1535 = vld [vmem:[%s1345 + $0x3c] sm:$0xe]
        %v1536 = vld [vmem:[%s1345 + $0x48] sm:$0xe]
        %v1537 = vld [vmem:[%s1345 + $0x54] sm:$0xe]
        %v1539 = vunpack.c.l.b16 %v1530
        %v1540 = vpack.c.b16 %v1365, %v1539
        %v1541 = vrot.slane %v1540, 1
        %v1542 = vrot.slane %v1412, 1
        %v1543 = vsel %vm374, %v1541, %v1542
        %v1545 = vunpack.c.l.b16 %v1531
        %v1546 = vpack.c.b16 %v1370, %v1545
        %v1547 = vrot.slane %v1546, 1
        %v1548 = vrot.slane %v1427, 1
        %v1549 = vsel %vm374, %v1547, %v1548
        %v1551 = vunpack.c.l.b16 %v1532
        %v1552 = vpack.c.b16 %v1375, %v1551
        %v1553 = vrot.slane %v1552, 1
        %v1554 = vrot.slane %v1442, 1
        %v1555 = vsel %vm374, %v1553, %v1554
        %v1557 = vunpack.c.l.b16 %v1533
        %v1558 = vpack.c.b16 %v1380, %v1557
        %v1559 = vrot.slane %v1558, 1
        %v1560 = vrot.slane %v1457, 1
        %v1561 = vsel %vm374, %v1559, %v1560
        %v1563 = vunpack.c.l.b16 %v1534
        %v1564 = vpack.c.b16 %v1385, %v1563
        %v1565 = vrot.slane %v1564, 1
        %v1566 = vrot.slane %v1472, 1
        %v1567 = vsel %vm374, %v1565, %v1566
        %v1569 = vunpack.c.l.b16 %v1535
        %v1570 = vpack.c.b16 %v1390, %v1569
        %v1571 = vrot.slane %v1570, 1
        %v1572 = vrot.slane %v1487, 1
        %v1573 = vsel %vm374, %v1571, %v1572
        %v1575 = vunpack.c.l.b16 %v1536
        %v1576 = vpack.c.b16 %v1395, %v1575
        %v1577 = vrot.slane %v1576, 1
        %v1578 = vrot.slane %v1502, 1
        %v1579 = vsel %vm374, %v1577, %v1578
        %v1581 = vunpack.c.l.b16 %v1537
        %v1582 = vpack.c.b16 %v1400, %v1581
        %v1583 = vrot.slane %v1582, 1
        %v1584 = vrot.slane %v1517, 1
        %v1585 = vsel %vm374, %v1583, %v1584
        %s1586 = sadd.s32 8, 1
        %s1587 = smul.u32 %s1586, 3
        %s1588 = smul.addr %s1587, 4
        %s1589 = scalar_lea.vmem %s167, %s1588
        %v1590 = vld [vmem:[%s1589] sm:$0xf]
        %v1591 = vld [vmem:[%s1589 + $0x4] sm:$0xf]
        %v1592 = vld [vmem:[%s1589 + $0xc] sm:$0xf]
        %v1593 = vld [vmem:[%s1589 + $0x10] sm:$0xf]
        %v1594 = vld [vmem:[%s1589 + $0x18] sm:$0xf]
        %v1595 = vld [vmem:[%s1589 + $0x1c] sm:$0xf]
        %v1596 = vld [vmem:[%s1589 + $0x24] sm:$0xf]
        %v1597 = vld [vmem:[%s1589 + $0x28] sm:$0xf]
        %v1598 = vld [vmem:[%s1589 + $0x30] sm:$0xf]
        %v1599 = vld [vmem:[%s1589 + $0x34] sm:$0xf]
        %v1600 = vld [vmem:[%s1589 + $0x3c] sm:$0xf]
        %v1601 = vld [vmem:[%s1589 + $0x40] sm:$0xf]
        %v1602 = vld [vmem:[%s1589 + $0x48] sm:$0xf]
        %v1603 = vld [vmem:[%s1589 + $0x4c] sm:$0xf]
        %v1604 = vld [vmem:[%s1589 + $0x54] sm:$0xf]
        %v1605 = vld [vmem:[%s1589 + $0x58] sm:$0xf]
        %v1608 = vunpack.c.l.b16 %v1590
        %v1609 = vunpack.c.l.b16 %v1591
        %v1610 = vpack.c.b16 %v1609, %v1608
        %v1613 = vunpack.c.l.b16 %v1592
        %v1614 = vunpack.c.l.b16 %v1593
        %v1615 = vpack.c.b16 %v1614, %v1613
        %v1618 = vunpack.c.l.b16 %v1594
        %v1619 = vunpack.c.l.b16 %v1595
        %v1620 = vpack.c.b16 %v1619, %v1618
        %v1623 = vunpack.c.l.b16 %v1596
        %v1624 = vunpack.c.l.b16 %v1597
        %v1625 = vpack.c.b16 %v1624, %v1623
        %v1628 = vunpack.c.l.b16 %v1598
        %v1629 = vunpack.c.l.b16 %v1599
        %v1630 = vpack.c.b16 %v1629, %v1628
        %v1633 = vunpack.c.l.b16 %v1600
        %v1634 = vunpack.c.l.b16 %v1601
        %v1635 = vpack.c.b16 %v1634, %v1633
        %v1638 = vunpack.c.l.b16 %v1602
        %v1639 = vunpack.c.l.b16 %v1603
        %v1640 = vpack.c.b16 %v1639, %v1638
        %v1643 = vunpack.c.l.b16 %v1604
        %v1644 = vunpack.c.l.b16 %v1605
        %v1645 = vpack.c.b16 %v1644, %v1643
        %v1646 = vld [vmem:[%s1589 + $0x8] sm:$0x1]
        %v1647 = vld [vmem:[%s1589 + $0x14] sm:$0x1]
        %v1648 = vld [vmem:[%s1589 + $0x20] sm:$0x1]
        %v1649 = vld [vmem:[%s1589 + $0x2c] sm:$0x1]
        %v1650 = vld [vmem:[%s1589 + $0x38] sm:$0x1]
        %v1651 = vld [vmem:[%s1589 + $0x44] sm:$0x1]
        %v1652 = vld [vmem:[%s1589 + $0x50] sm:$0x1]
        %v1653 = vld [vmem:[%s1589 + $0x5c] sm:$0x1]
        %v1655 = vunpack.c.l.b16 %v1646
        %v1656 = vpack.c.b16 %v1655, %v1655
        %v1658 = vshrl.u32 %v1610, 16
        %v1660 = vshll.u32 %v1610, 16
        %v1662 = vrot.slane %v1660, 1
        %v1663 = vor.u32 %v1658, %v1662
        %v1665 = vshll.u32 %v1656, 16
        %v1667 = vrot.slane %v1665, 1
        %v1668 = vsel %vm245, %v1663, %v1667
        %v1670 = vunpack.c.l.b16 %v1647
        %v1671 = vpack.c.b16 %v1670, %v1670
        %v1673 = vshrl.u32 %v1615, 16
        %v1675 = vshll.u32 %v1615, 16
        %v1677 = vrot.slane %v1675, 1
        %v1678 = vor.u32 %v1673, %v1677
        %v1680 = vshll.u32 %v1671, 16
        %v1682 = vrot.slane %v1680, 1
        %v1683 = vsel %vm245, %v1678, %v1682
        %v1685 = vunpack.c.l.b16 %v1648
        %v1686 = vpack.c.b16 %v1685, %v1685
        %v1688 = vshrl.u32 %v1620, 16
        %v1690 = vshll.u32 %v1620, 16
        %v1692 = vrot.slane %v1690, 1
        %v1693 = vor.u32 %v1688, %v1692
        %v1695 = vshll.u32 %v1686, 16
        %v1697 = vrot.slane %v1695, 1
        %v1698 = vsel %vm245, %v1693, %v1697
        %v1700 = vunpack.c.l.b16 %v1649
        %v1701 = vpack.c.b16 %v1700, %v1700
        %v1703 = vshrl.u32 %v1625, 16
        %v1705 = vshll.u32 %v1625, 16
        %v1707 = vrot.slane %v1705, 1
        %v1708 = vor.u32 %v1703, %v1707
        %v1710 = vshll.u32 %v1701, 16
        %v1712 = vrot.slane %v1710, 1
        %v1713 = vsel %vm245, %v1708, %v1712
        %v1715 = vunpack.c.l.b16 %v1650
        %v1716 = vpack.c.b16 %v1715, %v1715
        %v1718 = vshrl.u32 %v1630, 16
        %v1720 = vshll.u32 %v1630, 16
        %v1722 = vrot.slane %v1720, 1
        %v1723 = vor.u32 %v1718, %v1722
        %v1725 = vshll.u32 %v1716, 16
        %v1727 = vrot.slane %v1725, 1
        %v1728 = vsel %vm245, %v1723, %v1727
        %v1730 = vunpack.c.l.b16 %v1651
        %v1731 = vpack.c.b16 %v1730, %v1730
        %v1733 = vshrl.u32 %v1635, 16
        %v1735 = vshll.u32 %v1635, 16
        %v1737 = vrot.slane %v1735, 1
        %v1738 = vor.u32 %v1733, %v1737
        %v1740 = vshll.u32 %v1731, 16
        %v1742 = vrot.slane %v1740, 1
        %v1743 = vsel %vm245, %v1738, %v1742
        %v1745 = vunpack.c.l.b16 %v1652
        %v1746 = vpack.c.b16 %v1745, %v1745
        %v1748 = vshrl.u32 %v1640, 16
        %v1750 = vshll.u32 %v1640, 16
        %v1752 = vrot.slane %v1750, 1
        %v1753 = vor.u32 %v1748, %v1752
        %v1755 = vshll.u32 %v1746, 16
        %v1757 = vrot.slane %v1755, 1
        %v1758 = vsel %vm245, %v1753, %v1757
        %v1760 = vunpack.c.l.b16 %v1653
        %v1761 = vpack.c.b16 %v1760, %v1760
        %v1763 = vshrl.u32 %v1645, 16
        %v1765 = vshll.u32 %v1645, 16
        %v1767 = vrot.slane %v1765, 1
        %v1768 = vor.u32 %v1763, %v1767
        %v1770 = vshll.u32 %v1761, 16
        %v1772 = vrot.slane %v1770, 1
        %v1773 = vsel %vm245, %v1768, %v1772
        %v1774 = vld [vmem:[%s1589] sm:$0xe]
        %v1775 = vld [vmem:[%s1589 + $0xc] sm:$0xe]
        %v1776 = vld [vmem:[%s1589 + $0x18] sm:$0xe]
        %v1777 = vld [vmem:[%s1589 + $0x24] sm:$0xe]
        %v1778 = vld [vmem:[%s1589 + $0x30] sm:$0xe]
        %v1779 = vld [vmem:[%s1589 + $0x3c] sm:$0xe]
        %v1780 = vld [vmem:[%s1589 + $0x48] sm:$0xe]
        %v1781 = vld [vmem:[%s1589 + $0x54] sm:$0xe]
        %v1783 = vunpack.c.l.b16 %v1774
        %v1784 = vpack.c.b16 %v1609, %v1783
        %v1785 = vrot.slane %v1784, 1
        %v1786 = vrot.slane %v1656, 1
        %v1787 = vsel %vm374, %v1785, %v1786
        %v1789 = vunpack.c.l.b16 %v1775
        %v1790 = vpack.c.b16 %v1614, %v1789
        %v1791 = vrot.slane %v1790, 1
        %v1792 = vrot.slane %v1671, 1
        %v1793 = vsel %vm374, %v1791, %v1792
        %v1795 = vunpack.c.l.b16 %v1776
        %v1796 = vpack.c.b16 %v1619, %v1795
        %v1797 = vrot.slane %v1796, 1
        %v1798 = vrot.slane %v1686, 1
        %v1799 = vsel %vm374, %v1797, %v1798
        %v1801 = vunpack.c.l.b16 %v1777
        %v1802 = vpack.c.b16 %v1624, %v1801
        %v1803 = vrot.slane %v1802, 1
        %v1804 = vrot.slane %v1701, 1
        %v1805 = vsel %vm374, %v1803, %v1804
        %v1807 = vunpack.c.l.b16 %v1778
        %v1808 = vpack.c.b16 %v1629, %v1807
        %v1809 = vrot.slane %v1808, 1
        %v1810 = vrot.slane %v1716, 1
        %v1811 = vsel %vm374, %v1809, %v1810
        %v1813 = vunpack.c.l.b16 %v1779
        %v1814 = vpack.c.b16 %v1634, %v1813
        %v1815 = vrot.slane %v1814, 1
        %v1816 = vrot.slane %v1731, 1
        %v1817 = vsel %vm374, %v1815, %v1816
        %v1819 = vunpack.c.l.b16 %v1780
        %v1820 = vpack.c.b16 %v1639, %v1819
        %v1821 = vrot.slane %v1820, 1
        %v1822 = vrot.slane %v1746, 1
        %v1823 = vsel %vm374, %v1821, %v1822
        %v1825 = vunpack.c.l.b16 %v1781
        %v1826 = vpack.c.b16 %v1644, %v1825
        %v1827 = vrot.slane %v1826, 1
        %v1828 = vrot.slane %v1761, 1
        %v1829 = vsel %vm374, %v1827, %v1828
        %s1830 = sadd.s32 8, 2
        %s1831 = smul.u32 %s1830, 3
        %s1832 = smul.addr %s1831, 4
        %s1833 = scalar_lea.vmem %s167, %s1832
        %v1834 = vld [vmem:[%s1833] sm:$0xf]
        %v1835 = vld [vmem:[%s1833 + $0x4] sm:$0xf]
        %v1836 = vld [vmem:[%s1833 + $0xc] sm:$0xf]
        %v1837 = vld [vmem:[%s1833 + $0x10] sm:$0xf]
        %v1838 = vld [vmem:[%s1833 + $0x18] sm:$0xf]
        %v1839 = vld [vmem:[%s1833 + $0x1c] sm:$0xf]
        %v1840 = vld [vmem:[%s1833 + $0x24] sm:$0xf]
        %v1841 = vld [vmem:[%s1833 + $0x28] sm:$0xf]
        %v1842 = vld [vmem:[%s1833 + $0x30] sm:$0xf]
        %v1843 = vld [vmem:[%s1833 + $0x34] sm:$0xf]
        %v1844 = vld [vmem:[%s1833 + $0x3c] sm:$0xf]
        %v1845 = vld [vmem:[%s1833 + $0x40] sm:$0xf]
        %v1846 = vld [vmem:[%s1833 + $0x48] sm:$0xf]
        %v1847 = vld [vmem:[%s1833 + $0x4c] sm:$0xf]
        %v1848 = vld [vmem:[%s1833 + $0x54] sm:$0xf]
        %v1849 = vld [vmem:[%s1833 + $0x58] sm:$0xf]
        %v1852 = vunpack.c.l.b16 %v1834
        %v1853 = vunpack.c.l.b16 %v1835
        %v1854 = vpack.c.b16 %v1853, %v1852
        %v1857 = vunpack.c.l.b16 %v1836
        %v1858 = vunpack.c.l.b16 %v1837
        %v1859 = vpack.c.b16 %v1858, %v1857
        %v1862 = vunpack.c.l.b16 %v1838
        %v1863 = vunpack.c.l.b16 %v1839
        %v1864 = vpack.c.b16 %v1863, %v1862
        %v1867 = vunpack.c.l.b16 %v1840
        %v1868 = vunpack.c.l.b16 %v1841
        %v1869 = vpack.c.b16 %v1868, %v1867
        %v1872 = vunpack.c.l.b16 %v1842
        %v1873 = vunpack.c.l.b16 %v1843
        %v1874 = vpack.c.b16 %v1873, %v1872
        %v1877 = vunpack.c.l.b16 %v1844
        %v1878 = vunpack.c.l.b16 %v1845
        %v1879 = vpack.c.b16 %v1878, %v1877
        %v1882 = vunpack.c.l.b16 %v1846
        %v1883 = vunpack.c.l.b16 %v1847
        %v1884 = vpack.c.b16 %v1883, %v1882
        %v1887 = vunpack.c.l.b16 %v1848
        %v1888 = vunpack.c.l.b16 %v1849
        %v1889 = vpack.c.b16 %v1888, %v1887
        %v1890 = vld [vmem:[%s1833 + $0x8] sm:$0x1]
        %v1891 = vld [vmem:[%s1833 + $0x14] sm:$0x1]
        %v1892 = vld [vmem:[%s1833 + $0x20] sm:$0x1]
        %v1893 = vld [vmem:[%s1833 + $0x2c] sm:$0x1]
        %v1894 = vld [vmem:[%s1833 + $0x38] sm:$0x1]
        %v1895 = vld [vmem:[%s1833 + $0x44] sm:$0x1]
        %v1896 = vld [vmem:[%s1833 + $0x50] sm:$0x1]
        %v1897 = vld [vmem:[%s1833 + $0x5c] sm:$0x1]
        %v1899 = vunpack.c.l.b16 %v1890
        %v1900 = vpack.c.b16 %v1899, %v1899
        %v1902 = vshrl.u32 %v1854, 16
        %v1904 = vshll.u32 %v1854, 16
        %v1906 = vrot.slane %v1904, 1
        %v1907 = vor.u32 %v1902, %v1906
        %v1909 = vshll.u32 %v1900, 16
        %v1911 = vrot.slane %v1909, 1
        %v1912 = vsel %vm245, %v1907, %v1911
        %v1914 = vunpack.c.l.b16 %v1891
        %v1915 = vpack.c.b16 %v1914, %v1914
        %v1917 = vshrl.u32 %v1859, 16
        %v1919 = vshll.u32 %v1859, 16
        %v1921 = vrot.slane %v1919, 1
        %v1922 = vor.u32 %v1917, %v1921
        %v1924 = vshll.u32 %v1915, 16
        %v1926 = vrot.slane %v1924, 1
        %v1927 = vsel %vm245, %v1922, %v1926
        %v1929 = vunpack.c.l.b16 %v1892
        %v1930 = vpack.c.b16 %v1929, %v1929
        %v1932 = vshrl.u32 %v1864, 16
        %v1934 = vshll.u32 %v1864, 16
        %v1936 = vrot.slane %v1934, 1
        %v1937 = vor.u32 %v1932, %v1936
        %v1939 = vshll.u32 %v1930, 16
        %v1941 = vrot.slane %v1939, 1
        %v1942 = vsel %vm245, %v1937, %v1941
        %v1944 = vunpack.c.l.b16 %v1893
        %v1945 = vpack.c.b16 %v1944, %v1944
        %v1947 = vshrl.u32 %v1869, 16
        %v1949 = vshll.u32 %v1869, 16
        %v1951 = vrot.slane %v1949, 1
        %v1952 = vor.u32 %v1947, %v1951
        %v1954 = vshll.u32 %v1945, 16
        %v1956 = vrot.slane %v1954, 1
        %v1957 = vsel %vm245, %v1952, %v1956
        %v1959 = vunpack.c.l.b16 %v1894
        %v1960 = vpack.c.b16 %v1959, %v1959
        %v1962 = vshrl.u32 %v1874, 16
        %v1964 = vshll.u32 %v1874, 16
        %v1966 = vrot.slane %v1964, 1
        %v1967 = vor.u32 %v1962, %v1966
        %v1969 = vshll.u32 %v1960, 16
        %v1971 = vrot.slane %v1969, 1
        %v1972 = vsel %vm245, %v1967, %v1971
        %v1974 = vunpack.c.l.b16 %v1895
        %v1975 = vpack.c.b16 %v1974, %v1974
        %v1977 = vshrl.u32 %v1879, 16
        %v1979 = vshll.u32 %v1879, 16
        %v1981 = vrot.slane %v1979, 1
        %v1982 = vor.u32 %v1977, %v1981
        %v1984 = vshll.u32 %v1975, 16
        %v1986 = vrot.slane %v1984, 1
        %v1987 = vsel %vm245, %v1982, %v1986
        %v1989 = vunpack.c.l.b16 %v1896
        %v1990 = vpack.c.b16 %v1989, %v1989
        %v1992 = vshrl.u32 %v1884, 16
        %v1994 = vshll.u32 %v1884, 16
        %v1996 = vrot.slane %v1994, 1
        %v1997 = vor.u32 %v1992, %v1996
        %v1999 = vshll.u32 %v1990, 16
        %v2001 = vrot.slane %v1999, 1
        %v2002 = vsel %vm245, %v1997, %v2001
        %v2004 = vunpack.c.l.b16 %v1897
        %v2005 = vpack.c.b16 %v2004, %v2004
        %v2007 = vshrl.u32 %v1889, 16
        %v2009 = vshll.u32 %v1889, 16
        %v2011 = vrot.slane %v2009, 1
        %v2012 = vor.u32 %v2007, %v2011
        %v2014 = vshll.u32 %v2005, 16
        %v2016 = vrot.slane %v2014, 1
        %v2017 = vsel %vm245, %v2012, %v2016
        %v2018 = vld [vmem:[%s1833] sm:$0xe]
        %v2019 = vld [vmem:[%s1833 + $0xc] sm:$0xe]
        %v2020 = vld [vmem:[%s1833 + $0x18] sm:$0xe]
        %v2021 = vld [vmem:[%s1833 + $0x24] sm:$0xe]
        %v2022 = vld [vmem:[%s1833 + $0x30] sm:$0xe]
        %v2023 = vld [vmem:[%s1833 + $0x3c] sm:$0xe]
        %v2024 = vld [vmem:[%s1833 + $0x48] sm:$0xe]
        %v2025 = vld [vmem:[%s1833 + $0x54] sm:$0xe]
        %v2027 = vunpack.c.l.b16 %v2018
        %v2028 = vpack.c.b16 %v1853, %v2027
        %v2029 = vrot.slane %v2028, 1
        %v2030 = vrot.slane %v1900, 1
        %v2031 = vsel %vm374, %v2029, %v2030
        %v2033 = vunpack.c.l.b16 %v2019
        %v2034 = vpack.c.b16 %v1858, %v2033
        %v2035 = vrot.slane %v2034, 1
        %v2036 = vrot.slane %v1915, 1
        %v2037 = vsel %vm374, %v2035, %v2036
        %v2039 = vunpack.c.l.b16 %v2020
        %v2040 = vpack.c.b16 %v1863, %v2039
        %v2041 = vrot.slane %v2040, 1
        %v2042 = vrot.slane %v1930, 1
        %v2043 = vsel %vm374, %v2041, %v2042
        %v2045 = vunpack.c.l.b16 %v2021
        %v2046 = vpack.c.b16 %v1868, %v2045
        %v2047 = vrot.slane %v2046, 1
        %v2048 = vrot.slane %v1945, 1
        %v2049 = vsel %vm374, %v2047, %v2048
        %v2051 = vunpack.c.l.b16 %v2022
        %v2052 = vpack.c.b16 %v1873, %v2051
        %v2053 = vrot.slane %v2052, 1
        %v2054 = vrot.slane %v1960, 1
        %v2055 = vsel %vm374, %v2053, %v2054
        %v2057 = vunpack.c.l.b16 %v2023
        %v2058 = vpack.c.b16 %v1878, %v2057
        %v2059 = vrot.slane %v2058, 1
        %v2060 = vrot.slane %v1975, 1
        %v2061 = vsel %vm374, %v2059, %v2060
        %v2063 = vunpack.c.l.b16 %v2024
        %v2064 = vpack.c.b16 %v1883, %v2063
        %v2065 = vrot.slane %v2064, 1
        %v2066 = vrot.slane %v1990, 1
        %v2067 = vsel %vm374, %v2065, %v2066
        %v2069 = vunpack.c.l.b16 %v2025
        %v2070 = vpack.c.b16 %v1888, %v2069
        %v2071 = vrot.slane %v2070, 1
        %v2072 = vrot.slane %v2005, 1
        %v2073 = vsel %vm374, %v2071, %v2072
        %2074 = vrot.lane.b32.xlu0 %v1424, 4
        %v2075 = vpop.permute.xlu0 %2074
        %2076 = vrot.lane.b32.xlu0 %v1439, 4
        %v2077 = vpop.permute.xlu0 %2076
        %2078 = vrot.lane.b32.xlu0 %v1454, 4
        %v2079 = vpop.permute.xlu0 %2078
        %2080 = vrot.lane.b32.xlu0 %v1469, 4
        %v2081 = vpop.permute.xlu0 %2080
        %2082 = vrot.lane.b32.xlu0 %v1484, 4
        %v2083 = vpop.permute.xlu0 %2082
        %2084 = vrot.lane.b32.xlu0 %v1499, 4
        %v2085 = vpop.permute.xlu0 %2084
        %2086 = vrot.lane.b32.xlu0 %v1514, 4
        %v2087 = vpop.permute.xlu0 %2086
        %2088 = vrot.lane.b32.xlu0 %v1529, 4
        %v2089 = vpop.permute.xlu0 %2088
        %2090 = vrot.lane.b32.xlu0 %v1543, 8
        %v2091 = vpop.permute.xlu0 %2090
        %2092 = vrot.lane.b32.xlu0 %v1549, 8
        %v2093 = vpop.permute.xlu0 %2092
        %2094 = vrot.lane.b32.xlu0 %v1555, 8
        %v2095 = vpop.permute.xlu0 %2094
        %2096 = vrot.lane.b32.xlu0 %v1561, 8
        %v2097 = vpop.permute.xlu0 %2096
        %2098 = vrot.lane.b32.xlu0 %v1567, 8
        %v2099 = vpop.permute.xlu0 %2098
        %2100 = vrot.lane.b32.xlu0 %v1573, 8
        %v2101 = vpop.permute.xlu0 %2100
        %2102 = vrot.lane.b32.xlu0 %v1579, 8
        %v2103 = vpop.permute.xlu0 %2102
        %2104 = vrot.lane.b32.xlu0 %v1585, 8
        %v2105 = vpop.permute.xlu0 %2104
        %2106 = vrot.lane.b32.xlu0 %v1610, 12
        %v2107 = vpop.permute.xlu0 %2106
        %2108 = vrot.lane.b32.xlu0 %v1615, 12
        %v2109 = vpop.permute.xlu0 %2108
        %2110 = vrot.lane.b32.xlu0 %v1620, 12
        %v2111 = vpop.permute.xlu0 %2110
        %2112 = vrot.lane.b32.xlu0 %v1625, 12
        %v2113 = vpop.permute.xlu0 %2112
        %2114 = vrot.lane.b32.xlu0 %v1630, 12
        %v2115 = vpop.permute.xlu0 %2114
        %2116 = vrot.lane.b32.xlu0 %v1635, 12
        %v2117 = vpop.permute.xlu0 %2116
        %2118 = vrot.lane.b32.xlu0 %v1640, 12
        %v2119 = vpop.permute.xlu0 %2118
        %2120 = vrot.lane.b32.xlu0 %v1645, 12
        %v2121 = vpop.permute.xlu0 %2120
        %2122 = vrot.lane.b32.xlu0 %v1668, 16
        %v2123 = vpop.permute.xlu0 %2122
        %2124 = vrot.lane.b32.xlu0 %v1683, 16
        %v2125 = vpop.permute.xlu0 %2124
        %2126 = vrot.lane.b32.xlu0 %v1698, 16
        %v2127 = vpop.permute.xlu0 %2126
        %2128 = vrot.lane.b32.xlu0 %v1713, 16
        %v2129 = vpop.permute.xlu0 %2128
        %2130 = vrot.lane.b32.xlu0 %v1728, 16
        %v2131 = vpop.permute.xlu0 %2130
        %2132 = vrot.lane.b32.xlu0 %v1743, 16
        %v2133 = vpop.permute.xlu0 %2132
        %2134 = vrot.lane.b32.xlu0 %v1758, 16
        %v2135 = vpop.permute.xlu0 %2134
        %2136 = vrot.lane.b32.xlu0 %v1773, 16
        %v2137 = vpop.permute.xlu0 %2136
        %2138 = vrot.lane.b32.xlu0 %v1787, 20
        %v2139 = vpop.permute.xlu0 %2138
        %2140 = vrot.lane.b32.xlu0 %v1793, 20
        %v2141 = vpop.permute.xlu0 %2140
        %2142 = vrot.lane.b32.xlu0 %v1799, 20
        %v2143 = vpop.permute.xlu0 %2142
        %2144 = vrot.lane.b32.xlu0 %v1805, 20
        %v2145 = vpop.permute.xlu0 %2144
        %2146 = vrot.lane.b32.xlu0 %v1811, 20
        %v2147 = vpop.permute.xlu0 %2146
        %2148 = vrot.lane.b32.xlu0 %v1817, 20
        %v2149 = vpop.permute.xlu0 %2148
        %2150 = vrot.lane.b32.xlu0 %v1823, 20
        %v2151 = vpop.permute.xlu0 %2150
        %2152 = vrot.lane.b32.xlu0 %v1829, 20
        %v2153 = vpop.permute.xlu0 %2152
        %2154 = vrot.lane.b32.xlu0 %v1854, 24
        %v2155 = vpop.permute.xlu0 %2154
        %2156 = vrot.lane.b32.xlu0 %v1859, 24
        %v2157 = vpop.permute.xlu0 %2156
        %2158 = vrot.lane.b32.xlu0 %v1864, 24
        %v2159 = vpop.permute.xlu0 %2158
        %2160 = vrot.lane.b32.xlu0 %v1869, 24
        %v2161 = vpop.permute.xlu0 %2160
        %2162 = vrot.lane.b32.xlu0 %v1874, 24
        %v2163 = vpop.permute.xlu0 %2162
        %2164 = vrot.lane.b32.xlu0 %v1879, 24
        %v2165 = vpop.permute.xlu0 %2164
        %2166 = vrot.lane.b32.xlu0 %v1884, 24
        %v2167 = vpop.permute.xlu0 %2166
        %2168 = vrot.lane.b32.xlu0 %v1889, 24
        %v2169 = vpop.permute.xlu0 %2168
        %2170 = vrot.lane.b32.xlu0 %v1912, 28
        %v2171 = vpop.permute.xlu0 %2170
        %2172 = vrot.lane.b32.xlu0 %v1927, 28
        %v2173 = vpop.permute.xlu0 %2172
        %2174 = vrot.lane.b32.xlu0 %v1942, 28
        %v2175 = vpop.permute.xlu0 %2174
        %2176 = vrot.lane.b32.xlu0 %v1957, 28
        %v2177 = vpop.permute.xlu0 %2176
        %2178 = vrot.lane.b32.xlu0 %v1972, 28
        %v2179 = vpop.permute.xlu0 %2178
        %2180 = vrot.lane.b32.xlu0 %v1987, 28
        %v2181 = vpop.permute.xlu0 %2180
        %2182 = vrot.lane.b32.xlu0 %v2002, 28
        %v2183 = vpop.permute.xlu0 %2182
        %2184 = vrot.lane.b32.xlu0 %v2017, 28
        %v2185 = vpop.permute.xlu0 %2184
        %2186 = vrot.lane.b32.xlu0 %v2031, 32
        %v2187 = vpop.permute.xlu0 %2186
        %2188 = vrot.lane.b32.xlu0 %v2037, 32
        %v2189 = vpop.permute.xlu0 %2188
        %2190 = vrot.lane.b32.xlu0 %v2043, 32
        %v2191 = vpop.permute.xlu0 %2190
        %2192 = vrot.lane.b32.xlu0 %v2049, 32
        %v2193 = vpop.permute.xlu0 %2192
        %2194 = vrot.lane.b32.xlu0 %v2055, 32
        %v2195 = vpop.permute.xlu0 %2194
        %2196 = vrot.lane.b32.xlu0 %v2061, 32
        %v2197 = vpop.permute.xlu0 %2196
        %2198 = vrot.lane.b32.xlu0 %v2067, 32
        %v2199 = vpop.permute.xlu0 %2198
        %2200 = vrot.lane.b32.xlu0 %v2073, 32
        %v2201 = vpop.permute.xlu0 %2200
        %v2203 = vsel %vm1036, %v1366, %v2075
        %v2205 = vsel %vm1036, %v1371, %v2077
        %v2207 = vsel %vm1036, %v1376, %v2079
        %v2209 = vsel %vm1036, %v1381, %v2081
        %v2211 = vsel %vm1036, %v1386, %v2083
        %v2213 = vsel %vm1036, %v1391, %v2085
        %v2215 = vsel %vm1036, %v1396, %v2087
        %v2217 = vsel %vm1036, %v1401, %v2089
        %v2219 = vsel %vm1053, %v2203, %v2091
        %v2221 = vsel %vm1053, %v2205, %v2093
        %v2223 = vsel %vm1053, %v2207, %v2095
        %v2225 = vsel %vm1053, %v2209, %v2097
        %v2227 = vsel %vm1053, %v2211, %v2099
        %v2229 = vsel %vm1053, %v2213, %v2101
        %v2231 = vsel %vm1053, %v2215, %v2103
        %v2233 = vsel %vm1053, %v2217, %v2105
        %v2235 = vsel %vm1070, %v2219, %v2107
        %v2237 = vsel %vm1070, %v2221, %v2109
        %v2239 = vsel %vm1070, %v2223, %v2111
        %v2241 = vsel %vm1070, %v2225, %v2113
        %v2243 = vsel %vm1070, %v2227, %v2115
        %v2245 = vsel %vm1070, %v2229, %v2117
        %v2247 = vsel %vm1070, %v2231, %v2119
        %v2249 = vsel %vm1070, %v2233, %v2121
        %v2251 = vsel %vm1087, %v2235, %v2123
        %v2253 = vsel %vm1087, %v2237, %v2125
        %v2255 = vsel %vm1087, %v2239, %v2127
        %v2257 = vsel %vm1087, %v2241, %v2129
        %v2259 = vsel %vm1087, %v2243, %v2131
        %v2261 = vsel %vm1087, %v2245, %v2133
        %v2263 = vsel %vm1087, %v2247, %v2135
        %v2265 = vsel %vm1087, %v2249, %v2137
        %v2267 = vsel %vm1104, %v2251, %v2139
        %v2269 = vsel %vm1104, %v2253, %v2141
        %v2271 = vsel %vm1104, %v2255, %v2143
        %v2273 = vsel %vm1104, %v2257, %v2145
        %v2275 = vsel %vm1104, %v2259, %v2147
        %v2277 = vsel %vm1104, %v2261, %v2149
        %v2279 = vsel %vm1104, %v2263, %v2151
        %v2281 = vsel %vm1104, %v2265, %v2153
        %v2283 = vsel %vm1121, %v2267, %v2155
        %v2285 = vsel %vm1121, %v2269, %v2157
        %v2287 = vsel %vm1121, %v2271, %v2159
        %v2289 = vsel %vm1121, %v2273, %v2161
        %v2291 = vsel %vm1121, %v2275, %v2163
        %v2293 = vsel %vm1121, %v2277, %v2165
        %v2295 = vsel %vm1121, %v2279, %v2167
        %v2297 = vsel %vm1121, %v2281, %v2169
        %v2299 = vsel %vm1138, %v2283, %v2171
        %v2301 = vsel %vm1138, %v2285, %v2173
        %v2303 = vsel %vm1138, %v2287, %v2175
        %v2305 = vsel %vm1138, %v2289, %v2177
        %v2307 = vsel %vm1138, %v2291, %v2179
        %v2309 = vsel %vm1138, %v2293, %v2181
        %v2311 = vsel %vm1138, %v2295, %v2183
        %v2313 = vsel %vm1138, %v2297, %v2185
        %v2315 = vsel %vm1155, %v2299, %v2187
        %v2317 = vsel %vm1155, %v2301, %v2189
        %v2319 = vsel %vm1155, %v2303, %v2191
        %v2321 = vsel %vm1155, %v2305, %v2193
        %v2323 = vsel %vm1155, %v2307, %v2195
        %v2325 = vsel %vm1155, %v2309, %v2197
        %v2327 = vsel %vm1155, %v2311, %v2199
        %v2329 = vsel %vm1155, %v2313, %v2201
        %v2330 = vsel %vm1193, %v2315, 0
        %v2332 = vsel %vm1193, %v2317, 0
        %v2334 = vsel %vm1193, %v2319, 0
        %v2336 = vsel %vm1193, %v2321, 0
        %v2338 = vsel %vm1193, %v2323, 0
        %v2340 = vsel %vm1193, %v2325, 0
        %v2342 = vsel %vm1193, %v2327, 0
        %v2344 = vsel %vm1193, %v2329, 0
        %2346 = vmatprep.subr.bf16.mxu0 0
        %2347 = vmatpush1.bf16.msra.mxu0 %v1188
        %2348 = vmatprep.subr.bf16.mxu0 0
        %2349 = vmatpush1.bf16.msra.mxu0 %v1189
        %2350 = vmatprep.subr.bf16.mxu0 0
        %2351 = vmatpush1.bf16.msra.mxu0 %v1212
        %2352 = vmatprep.subr.bf16.mxu0 0
        %2353 = vmatpush1.bf16.msra.mxu0 0
        %2354 = vmatprep.subr.bf16.mxu0 0
        %2355 = vmatpush1.bf16.msra.mxu0 0
        %2356 = vmatprep.subr.bf16.mxu0 0
        %2357 = vmatpush1.bf16.msra.mxu0 0
        %2358 = vmatprep.subr.bf16.mxu0 0
        %2359 = vmatpush1.bf16.msra.mxu0 0
        %2360 = vmatprep.subr.bf16.mxu0 0
        %2361 = vmatpush1.bf16.msra.mxu0 0
        %2362 = vmatprep.subr.bf16.mxu0 0
        %2363 = vmatpush1.bf16.msra.mxu0 0
        %2364 = vmatprep.subr.bf16.mxu0 0
        %2365 = vmatpush1.bf16.msra.mxu0 0
        %2366 = vmatprep.subr.bf16.mxu0 0
        %2367 = vmatpush1.bf16.msra.mxu0 0
        %2368 = vmatprep.subr.bf16.mxu0 0
        %2369 = vmatpush1.bf16.msra.mxu0 0
        %2370 = vmatprep.subr.bf16.mxu0 0
        %2371 = vmatpush1.bf16.msra.mxu0 0
        %2372 = vmatprep.subr.bf16.mxu0 0
        %2373 = vmatpush1.bf16.msra.mxu0 0
        %2374 = vmatprep.subr.bf16.mxu0 0
        %2375 = vmatpush1.bf16.msra.mxu0 0
        %2376 = vmatprep.subr.bf16.mxu0 0
        %2377 = vmatpush1.bf16.msra.mxu0 0
        %2378 = vmatprep.mubr.bf16.mxu0 0
        %2379 = vmatmul.mubr.bf16.gmra.mrb[0].mxu0 %v2330
        %v2380 = vpop.f32.mrb[0].mxu0
        %v2381 = vadd.f32 %v1176, %v2380
        %v2382 = vpop.f32.mrb[0].mxu0
        %v2383 = vpop.f32.mrb[0].mxu0
        %v2384 = vadd.f32 %v1176, %v2383
        %v2385 = vpop.f32.mrb[0].mxu0
        %2386 = vmatprep.mubr.bf16.mxu0 0
        %2387 = vmatmul.mubr.bf16.gmra.mrb[0].mxu0 %v2332
        %v2388 = vpop.f32.mrb[0].mxu0
        %v2389 = vadd.f32 %v1176, %v2388
        %v2390 = vpop.f32.mrb[0].mxu0
        %v2391 = vpop.f32.mrb[0].mxu0
        %v2392 = vadd.f32 %v1176, %v2391
        %v2393 = vpop.f32.mrb[0].mxu0
        %2394 = vmatprep.mubr.bf16.mxu0 0
        %2395 = vmatmul.mubr.bf16.gmra.mrb[0].mxu0 %v2334
        %v2396 = vpop.f32.mrb[0].mxu0
        %v2397 = vadd.f32 %v1176, %v2396
        %v2398 = vpop.f32.mrb[0].mxu0
        %v2399 = vpop.f32.mrb[0].mxu0
        %v2400 = vadd.f32 %v1176, %v2399
        %v2401 = vpop.f32.mrb[0].mxu0
        %2402 = vmatprep.mubr.bf16.mxu0 0
        %2403 = vmatmul.mubr.bf16.gmra.mrb[0].mxu0 %v2336
        %v2404 = vpop.f32.mrb[0].mxu0
        %v2405 = vadd.f32 %v1176, %v2404
        %v2406 = vpop.f32.mrb[0].mxu0
        %v2407 = vpop.f32.mrb[0].mxu0
        %v2408 = vadd.f32 %v1176, %v2407
        %v2409 = vpop.f32.mrb[0].mxu0
        %2410 = vmatprep.mubr.bf16.mxu0 0
        %2411 = vmatmul.mubr.bf16.gmra.mrb[0].mxu0 %v2338
        %v2412 = vpop.f32.mrb[0].mxu0
        %v2413 = vadd.f32 %v1176, %v2412
        %v2414 = vpop.f32.mrb[0].mxu0
        %v2415 = vpop.f32.mrb[0].mxu0
        %v2416 = vadd.f32 %v1176, %v2415
        %v2417 = vpop.f32.mrb[0].mxu0
        %2418 = vmatprep.mubr.bf16.mxu0 0
        %2419 = vmatmul.mubr.bf16.gmra.mrb[0].mxu0 %v2340
        %v2420 = vpop.f32.mrb[0].mxu0
        %v2421 = vadd.f32 %v1176, %v2420
        %v2422 = vpop.f32.mrb[0].mxu0
        %v2423 = vpop.f32.mrb[0].mxu0
        %v2424 = vadd.f32 %v1176, %v2423
        %v2425 = vpop.f32.mrb[0].mxu0
        %2426 = vmatprep.mubr.bf16.mxu0 0
        %2427 = vmatmul.mubr.bf16.gmra.mrb[0].mxu0 %v2342
        %v2428 = vpop.f32.mrb[0].mxu0
        %v2429 = vadd.f32 %v1176, %v2428
        %v2430 = vpop.f32.mrb[0].mxu0
        %v2431 = vpop.f32.mrb[0].mxu0
        %v2432 = vadd.f32 %v1176, %v2431
        %v2433 = vpop.f32.mrb[0].mxu0
        %2434 = vmatprep.mubr.bf16.mxu0 0
        %2435 = vmatmul.mubr.bf16.gmra.mrb[0].mxu0 %v2344
        %v2436 = vpop.f32.mrb[0].mxu0
        %v2437 = vadd.f32 %v1176, %v2436
        %v2438 = vpop.f32.mrb[0].mxu0
        %v2439 = vpop.f32.mrb[0].mxu0
        %v2440 = vadd.f32 %v1176, %v2439
        %v2441 = vpop.f32.mrb[0].mxu0
        %2442 = vdwg.mxu0
        %v2443 = vmax.f32 %v2381, 0.0
        %v2444 = vmax.f32 %v2384, 0.0
        %v2445 = vmax.f32 %v2389, 0.0
        %v2446 = vmax.f32 %v2392, 0.0
        %v2447 = vmax.f32 %v2397, 0.0
        %v2448 = vmax.f32 %v2400, 0.0
        %v2449 = vmax.f32 %v2405, 0.0
        %v2450 = vmax.f32 %v2408, 0.0
        %v2451 = vmax.f32 %v2413, 0.0
        %v2452 = vmax.f32 %v2416, 0.0
        %v2453 = vmax.f32 %v2421, 0.0
        %v2454 = vmax.f32 %v2424, 0.0
        %v2455 = vmax.f32 %v2429, 0.0
        %v2456 = vmax.f32 %v2432, 0.0
        %v2457 = vmax.f32 %v2437, 0.0
        %v2458 = vmax.f32 %v2440, 0.0
        %v2459 = vadd.f32 %v1327, %v2443
        %v2460 = vadd.f32 %v1328, %v2444
        %v2461 = vadd.f32 %v1329, %v2445
        %v2462 = vadd.f32 %v1330, %v2446
        %v2463 = vadd.f32 %v1331, %v2447
        %v2464 = vadd.f32 %v1332, %v2448
        %v2465 = vadd.f32 %v1333, %v2449
        %v2466 = vadd.f32 %v1334, %v2450
        %v2467 = vadd.f32 %v1335, %v2451
        %v2468 = vadd.f32 %v1336, %v2452
        %v2469 = vadd.f32 %v1337, %v2453
        %v2470 = vadd.f32 %v1338, %v2454
        %v2471 = vadd.f32 %v1339, %v2455
        %v2472 = vadd.f32 %v1340, %v2456
        %v2473 = vadd.f32 %v1341, %v2457
        %v2474 = vadd.f32 %v1342, %v2458
        %v2475 = vadd.f32 %v2459, %v2460
        %v2476 = vadd.f32 %v2475, %v2461
        %v2477 = vadd.f32 %v2476, %v2462
        %v2478 = vadd.f32 %v2477, %v2463
        %v2479 = vadd.f32 %v2478, %v2464
        %v2480 = vadd.f32 %v2479, %v2465
        %v2481 = vadd.f32 %v2480, %v2466
        %v2482 = vadd.f32 %v2481, %v2467
        %v2483 = vadd.f32 %v2482, %v2468
        %v2484 = vadd.f32 %v2483, %v2469
        %v2485 = vadd.f32 %v2484, %v2470
        %v2486 = vadd.f32 %v2485, %v2471
        %v2487 = vadd.f32 %v2486, %v2472
        %v2488 = vadd.f32 %v2487, %v2473
        %v2489 = vadd.f32 %v2488, %v2474
        %v2490 = vrot.slane %v2489, 4
        %v2491 = vadd.f32 %v2489, %v2490
        %v2492 = vrot.slane %v2491, 2
        %v2493 = vadd.f32 %v2491, %v2492
        %v2494 = vrot.slane %v2493, 1
        %v2495 = vadd.f32 %v2493, %v2494
        %v2496 = vmul.f32 %v2495, 0.00390625
        %2497 = vst [vmem:[%s162] sm:$0x1] %v2496
        %s2498 = sand.u32 %s93, 1
        %s2499 = scalar_lea.sflag [#allocation3], %s2498
        %s2500 = sand.u32 %s93, 1
        %s2501 = scalar_lea.vmem [#allocation2], %s2500
        // Predicated region
        $region33: #{tpu_custom_call.1} parent=31 // pred_check
          %p2502 = pneg %p103
        $region34: #{tpu_custom_call.1} parent=31 // pred_check_branch
          %2504 = sbr.rel (%p2502) target = $region36
        $region35: #{tpu_custom_call.1} parent=31 // pred_region
          %s2506 = ssub.s32 16, 16
          %2507 = vsyncadd %s2499, %s2506
          %s2508 = smul.addr %s17, 16
          %s2509 = scalar_lea.hbm %s3, %s2508
          %s2511 = sshll.u32 %s2501, 4
          %s2512 = int_to_ptr.vmem [resolvable:$true] %s2511
          %2514 = dma.vmem_to_hbm [thread:$0]  %s2512, 16, %s2509, %s2499
        $region36: #{tpu_custom_call.1} parent=31 // pred_fallthru
          _
      $region32: #{tpu_custom_call.1} parent=5 // pred_fallthru
        _
      %p2515 = scmp.le.s32.totalorder 2, %s12
      // Predicated region
      $region37: #{tpu_custom_call.1} parent=5 // pred_check
        %p2516 = pneg %p2515
      $region38: #{tpu_custom_call.1} parent=5 // pred_check_branch
        %2518 = sbr.rel (%p2516) target = $region40
      $region39: #{tpu_custom_call.1} parent=5 // pred_region
        %s2519 = ssub.s32 %s12, 2
        // Predicated region
        $region41: #{tpu_custom_call.1} parent=39 // pred_check
          %p2520 = pneg %p109
        $region42: #{tpu_custom_call.1} parent=39 // pred_check_branch
          %2522 = sbr.rel (%p2520) target = $region44
        $region43: #{tpu_custom_call.1} parent=39 // pred_region
          %s2523 = sand.u32 %s94, 1
          %s2524 = scalar_lea.sflag [#allocation3], %s2523
          %s2525 = sand.u32 %s94, 1
          %s2526 = scalar_lea.vmem [#allocation2], %s2525
          %2527 = dma.done %s2524, 16
        $region44: #{tpu_custom_call.1} parent=39 // pred_fallthru
          _
      $region40: #{tpu_custom_call.1} parent=5 // pred_fallthru
        _
    $region6: #{tpu_custom_call.1} parent=1 // loop_footer
      %s16 = sadd.s32 1, %s12
    $region7: #{tpu_custom_call.1} parent=1 // loop_footer_branch
      %11 = sbr.rel target = $region3
    $region8: #{tpu_custom_call.1} parent=1 // loop_exit
      _
    %2528 = vsyncpa [#allocation3], 1
    %s2529 = scalar_lea.sflag [#allocation3], 1
    %2530 = vsyncpa %s2529, 1

</llo_original>
